<compile_context>
chip_gen: v5e
topology: v5e:2x2
jax: 0.10.0
libtpu: 0.0.40
codegen_flags: <defaults>
</compile_context>

<pallas_src>
import math
import numpy as np

import jax
import jax.numpy as jnp
from jax.experimental import pallas as pl
from jax.experimental.pallas import tpu as pltpu


def positional_encoding(S, D):
    """PyTorch PositionalEncoding buffer, sliced to seq-len S: (S, D)."""
    assert D % 2 == 0, "positional encoding assumes even d_model"
    pos = np.arange(S)[:, None].astype(np.float32)
    div = np.exp(np.arange(0, D, 2).astype(np.float32) * -(math.log(10000.0) / D))
    pe = np.zeros((S, D), np.float32)
    pe[:, 0::2] = np.sin(pos * div)
    pe[:, 1::2] = np.cos(pos * div)
    return jnp.asarray(pe)


def _make_kernel(num_layers, seq_len, batch):
    L, S, B = num_layers, seq_len, batch
    bf16 = jnp.bfloat16

    def kernel(src_ref, pe_ref, hm_ref,
               win_ref,
               wqkv_ref, bqkv_ref, wo_ref, bo_ref,
               ln1_g_ref, ln1_b_ref, ln2_g_ref, ln2_b_ref,
               ff1_w_ref, ff1_b_ref, ff2_w_ref, ff2_b_ref,
               wout_ref, bout_ref, out_ref):
        D = win_ref.shape[1]

        def mm(a, w_bf16):
            # bf16 MXU operands, f32 accumulate.
            return jnp.dot(a.astype(bf16), w_bf16,
                           preferred_element_type=jnp.float32)

        def layernorm(x, g, beta, eps=1e-5):
            # One-pass LN: E[x] and E[x*x] reduce back-to-back on the XLU.
            mu = jnp.mean(x, axis=-1, keepdims=True)
            ms = jnp.mean(x * x, axis=-1, keepdims=True)
            var = ms - mu * mu
            return (x - mu) * jax.lax.rsqrt(var + eps) * g + beta

        hm = hm_ref[...]          # (D, D) bf16 block-diag head-pool / sqrt(dk)
        pe = pe_ref[...]          # (S, D) f32, b_in already folded in
        w_in = win_ref[...]       # (IN, D) bf16

        # Input projection, per-batch rows (contiguous, 8-aligned sublane
        # blocks of the batch-major (B*S, IN) input).  Activations live as a
        # per-batch list of (S, D) f32 locals for the whole kernel — no
        # concat / slice materializations.
        xs = [mm(src_ref[b * S:(b + 1) * S, :], w_in) + pe for b in range(B)]

        for l in range(L):        # static unroll; L is tiny
            wqkv = wqkv_ref[l]    # (D, 3D) bf16
            bqkv = bqkv_ref[l]    # (1, 3D) f32
            wo = wo_ref[l]        # (D, D)  bf16
            bo = bo_ref[l]        # (1, D)  f32
            f1w = ff1_w_ref[l]; f1b = ff1_b_ref[l]
            f2w = ff2_w_ref[l]; f2b = ff2_b_ref[l]
            g1 = ln1_g_ref[l]; b1 = ln1_b_ref[l]
            g2 = ln2_g_ref[l]; b2 = ln2_b_ref[l]

            # Fused QKV: one (S, D) x (D, 3D) MXU pass per batch.
            qkv = [mm(xs[b], wqkv) + bqkv for b in range(B)]
            qs = [t[:, 0 * D:1 * D] for t in qkv]
            ks = [t[:, 1 * D:2 * D] for t in qkv]
            vs = [t[:, 2 * D:3 * D] for t in qkv]

            new_xs = []
            for i in range(B):
                # Attention over the *batch* axis (reference semantics) as an
                # online softmax over key-batch j.  Score block (i, j):
                # elementwise q_i*k_j on the VPU, then one tiny (S,D)x(D,D)
                # MXU pass with a block-diagonal head-pool matrix (reduces
                # over d_k and re-broadcasts across each head's lanes,
                # 1/sqrt(dk) folded in).  Running (m, denom, num) keeps live
                # temporaries O(1) in B.
                sc = mm(qs[i] * ks[0], hm)          # (S, D) f32
                m = sc
                denom = jnp.ones_like(sc)
                num = vs[0]
                for j in range(1, B):
                    scj = mm(qs[i] * ks[j], hm)
                    m_new = jnp.maximum(m, scj)
                    alpha = jnp.exp(m - m_new)
                    p = jnp.exp(scj - m_new)
                    denom = alpha * denom + p
                    num = alpha * num + p * vs[j]
                    m = m_new
                ctx = num * pl.reciprocal(denom, approx=False)

                # Single full-Wo output projection.
                attn = mm(ctx, wo) + bo

                # dropout is identity at inference time
                x2 = layernorm(xs[i] + attn, g1, b1)
                h1 = jnp.maximum(mm(x2, f1w) + f1b, 0.0)
                f = mm(h1, f2w) + f2b
                new_xs.append(layernorm(x2 + f, g2, b2))
            xs = new_xs

        # Lane-dense output store: W_out zero-padded to 128 lanes (wrapper
        # slices the true feature dim and the pred_len tail afterwards).
        w_out = wout_ref[...]
        b_out = bout_ref[...]
        for b in range(B):
            out_ref[b * S:(b + 1) * S, :] = mm(xs[b], w_out) + b_out

    return kernel


def transformer_forward(src, params, num_heads, pred_len):
    S, B, IN = src.shape
    D = params['w_in'].shape[1]
    L = params['qkvo_w'].shape[0]
    assert D % num_heads == 0
    dk = D // num_heads
    OUT_PAD = 128

    # ---- layout / weight plumbing (plain JAX, outside the kernel) ----
    # Batch-major 2D activations: row index = b*S + s.
    src2d = jnp.transpose(src, (1, 0, 2)).reshape(B * S, IN)

    # b_in folded into the positional-encoding slab (constants -> free).
    pe = (positional_encoding(S, D) + params['b_in']).astype(jnp.float32)

    # Fused QKV weights/biases: (L, D, 3D) bf16, (L, 1, 3D) f32.
    wqkv = jnp.concatenate([params['qkvo_w'][:, 0], params['qkvo_w'][:, 1],
                            params['qkvo_w'][:, 2]], axis=-1).astype(jnp.bfloat16)
    bqkv = jnp.concatenate([params['qkvo_b'][:, 0], params['qkvo_b'][:, 1],
                            params['qkvo_b'][:, 2]], axis=-1)
    wo = params['qkvo_w'][:, 3].astype(jnp.bfloat16)
    bo = params['qkvo_b'][:, 3]

    # Block-diagonal head-pool + re-broadcast matrix, 1/sqrt(dk) folded in.
    hm = np.zeros((D, D), np.float32)
    for h in range(num_heads):
        hm[h * dk:(h + 1) * dk, h * dk:(h + 1) * dk] = 1.0 / math.sqrt(dk)
    hm = jnp.asarray(hm).astype(jnp.bfloat16)

    # Lane-dense padded output projection (avoids masked vst.msk stores).
    w_out_pad = jnp.zeros((D, OUT_PAD), jnp.float32).at[:, :IN].set(
        params['w_out']).astype(jnp.bfloat16)
    b_out_pad = jnp.zeros((1, OUT_PAD), jnp.float32).at[:, :IN].set(params['b_out'])

    args = (src2d, pe, hm,
            params['w_in'].astype(jnp.bfloat16),
            wqkv, bqkv, wo, bo,
            params['ln_g'][:, 0], params['ln_b'][:, 0],
            params['ln_g'][:, 1], params['ln_b'][:, 1],
            params['ff1_w'].astype(jnp.bfloat16), params['ff1_b'],
            params['ff2_w'].astype(jnp.bfloat16), params['ff2_b'],
            w_out_pad, b_out_pad)

    vspec = pl.BlockSpec(memory_space=pltpu.MemorySpace.VMEM)
    out2d = pl.pallas_call(
        _make_kernel(L, S, B),
        out_shape=jax.ShapeDtypeStruct((B * S, OUT_PAD), jnp.float32),
        in_specs=[vspec] * len(args),
        out_specs=vspec,
    )(*args)

    # Undo layout plumbing: (B*S, 128) -> (pred_len, B, IN), seq-major.
    out = out2d[:, :IN].reshape(B, S, IN)[:, S - pred_len:, :]
    return jnp.transpose(out, (1, 0, 2))


def init_params(key, input_size, d_model, num_heads, num_layers, dim_ff=256):
    def lin_init(k, fan_in, fan_out):
        bound = 1.0 / math.sqrt(fan_in)
        kw, kb = jax.random.split(k)
        w = jax.random.uniform(kw, (fan_in, fan_out), jnp.float32, -bound, bound)
        b = jax.random.uniform(kb, (1, fan_out), jnp.float32, -bound, bound)
        return w, b

    keys = jax.random.split(key, 2 + num_layers)
    w_in, b_in = lin_init(keys[0], input_size, d_model)
    w_out, b_out = lin_init(keys[1], d_model, input_size)

    qkvo_w, qkvo_b, ff1_w, ff1_b, ff2_w, ff2_b = [], [], [], [], [], []
    for l in range(num_layers):
        lk = jax.random.split(keys[2 + l], 6)
        ws, bs = zip(*[lin_init(lk[i], d_model, d_model) for i in range(4)])
        qkvo_w.append(jnp.stack(ws))   # (4, D, D)
        qkvo_b.append(jnp.stack(bs))   # (4, 1, D)
        w1, b1 = lin_init(lk[4], d_model, dim_ff)
        w2, b2 = lin_init(lk[5], dim_ff, d_model)
        ff1_w.append(w1); ff1_b.append(b1)
        ff2_w.append(w2); ff2_b.append(b2)

    L, D = num_layers, d_model
    return dict(
        w_in=w_in, b_in=b_in, w_out=w_out, b_out=b_out,
        qkvo_w=jnp.stack(qkvo_w), qkvo_b=jnp.stack(qkvo_b),
        ln_g=jnp.ones((L, 2, 1, D), jnp.float32),
        ln_b=jnp.zeros((L, 2, 1, D), jnp.float32),
        ff1_w=jnp.stack(ff1_w), ff1_b=jnp.stack(ff1_b),
        ff2_w=jnp.stack(ff2_w), ff2_b=jnp.stack(ff2_b),
    )


def reference_forward(src, params, num_heads, pred_len):
    """Pure-JAX (f32) replica of the PyTorch forward for sanity checking."""
    S, B, _ = src.shape
    D = params['w_in'].shape[1]
    nh = num_heads
    dk = D // nh
    scale = math.sqrt(dk)

    def lin(x, w, b):
        return jnp.einsum('sbi,io->sbo', x, w) + b

    def layernorm(x, g, bt, eps=1e-5):
        mu = jnp.mean(x, axis=-1, keepdims=True)
        var = jnp.mean((x - mu) ** 2, axis=-1, keepdims=True)
        return (x - mu) * jax.lax.rsqrt(var + eps) * g + bt

    x = lin(src, params['w_in'], params['b_in'])
    x = x + positional_encoding(S, D)[:, None, :]
    L = params['qkvo_w'].shape[0]
    for l in range(L):
        q = lin(x, params['qkvo_w'][l, 0], params['qkvo_b'][l, 0])
        k = lin(x, params['qkvo_w'][l, 1], params['qkvo_b'][l, 1])
        v = lin(x, params['qkvo_w'][l, 2], params['qkvo_b'][l, 2])
        qh = q.reshape(S, B, nh, dk).transpose(0, 2, 1, 3)
        kh = k.reshape(S, B, nh, dk).transpose(0, 2, 1, 3)
        vh = v.reshape(S, B, nh, dk).transpose(0, 2, 1, 3)
        scores = jnp.einsum('shqd,shkd->shqk', qh, kh) / scale
        attn = jax.nn.softmax(scores, axis=-1)
        ctx = jnp.einsum('shqk,shkd->shqd', attn, vh)
        ctx2 = ctx.transpose(0, 2, 1, 3).reshape(S, B, D)
        a = jnp.einsum('sbi,io->sbo', ctx2, params['qkvo_w'][l, 3]) + params['qkvo_b'][l, 3]
        x2 = layernorm(x + a, params['ln_g'][l, 0], params['ln_b'][l, 0])
        h1 = jax.nn.relu(lin(x2, params['ff1_w'][l], params['ff1_b'][l]))
        f = lin(h1, params['ff2_w'][l], params['ff2_b'][l])
        x = layernorm(x2 + f, params['ln_g'][l, 1], params['ln_b'][l, 1])
    tail = x[S - pred_len:]
    return lin(tail, params['w_out'], params['b_out'])


if __name__ == "__main__":
    input_size, d_model, num_heads, num_layers, pred_len = 4, 32, 4, 2, 4
    S, B = 8, 2

    key = jax.random.PRNGKey(0)
    kp, kx = jax.random.split(key)
    params = init_params(kp, input_size, d_model, num_heads, num_layers)
    src = jax.random.normal(kx, (S, B, input_size), jnp.float32)

    out = transformer_forward(src, params, num_heads, pred_len)
    out = jax.block_until_ready(out)

    ref = reference_forward(src, params, num_heads, pred_len)
    assert out.shape == (pred_len, B, input_size)
    # Tolerance widened slightly vs. the pure-f32 version: matmul operands are
    # bf16 (f32 accumulate), which consumes part of the numeric budget.
    np.testing.assert_allclose(np.asarray(out), np.asarray(ref), rtol=3e-2, atol=3e-2)

    print("KERNEL_OK")
</pallas_src>

<mosaic_0001>
module attributes {stable_mosaic.version = 11 : i64} {
  func.func @kernel(%arg0: memref<16x4xf32, #tpu.memory_space<vmem>>, %arg1: memref<8x32xf32, #tpu.memory_space<vmem>>, %arg2: memref<32x32xbf16, #tpu.memory_space<vmem>>, %arg3: memref<4x32xbf16, #tpu.memory_space<vmem>>, %arg4: memref<2x32x96xbf16, #tpu.memory_space<vmem>>, %arg5: memref<2x1x96xf32, #tpu.memory_space<vmem>>, %arg6: memref<2x32x32xbf16, #tpu.memory_space<vmem>>, %arg7: memref<2x1x32xf32, #tpu.memory_space<vmem>>, %arg8: memref<2x1x32xf32, #tpu.memory_space<vmem>>, %arg9: memref<2x1x32xf32, #tpu.memory_space<vmem>>, %arg10: memref<2x1x32xf32, #tpu.memory_space<vmem>>, %arg11: memref<2x1x32xf32, #tpu.memory_space<vmem>>, %arg12: memref<2x32x256xbf16, #tpu.memory_space<vmem>>, %arg13: memref<2x1x256xf32, #tpu.memory_space<vmem>>, %arg14: memref<2x256x32xbf16, #tpu.memory_space<vmem>>, %arg15: memref<2x1x32xf32, #tpu.memory_space<vmem>>, %arg16: memref<32x128xbf16, #tpu.memory_space<vmem>>, %arg17: memref<1x128xf32, #tpu.memory_space<vmem>>, %arg18: memref<16x128xf32, #tpu.memory_space<vmem>>) attributes {dimension_semantics = [], scalar_prefetch = 0 : i64, scratch_operands = 0 : i64, tpu.core_type = #tpu.core_type<tc>} {
    %c0 = arith.constant 0 : index
    %c0_0 = arith.constant 0 : index
    %0 = vector.load %arg2[%c0, %c0_0] : memref<32x32xbf16, #tpu.memory_space<vmem>>, vector<32x32xbf16>
    %c0_1 = arith.constant 0 : index
    %c0_2 = arith.constant 0 : index
    %1 = vector.load %arg1[%c0_1, %c0_2] : memref<8x32xf32, #tpu.memory_space<vmem>>, vector<8x32xf32>
    %c0_3 = arith.constant 0 : index
    %c0_4 = arith.constant 0 : index
    %2 = vector.load %arg3[%c0_3, %c0_4] : memref<4x32xbf16, #tpu.memory_space<vmem>>, vector<4x32xbf16>
    %c0_5 = arith.constant 0 : index
    %c0_6 = arith.constant 0 : index
    %3 = vector.load %arg0[%c0_5, %c0_6] : memref<16x4xf32, #tpu.memory_space<vmem>>, vector<8x4xf32>
    %4 = arith.truncf %3 : vector<8x4xf32> to vector<8x4xbf16>
    %cst = arith.constant dense<0.000000e+00> : vector<8x32xf32>
    %5 = tpu.matmul %4, %2, %cst {dimension_numbers = #tpu.dot_dimension_numbers<[1], [0], [0], [1], [0, 0, 1, 1], [], []>} : vector<8x4xbf16>, vector<4x32xbf16>, vector<8x32xf32> -> vector<8x32xf32>
    %6 = arith.addf %5, %1 : vector<8x32xf32>
    %c8 = arith.constant 8 : index
    %c0_7 = arith.constant 0 : index
    %7 = vector.load %arg0[%c8, %c0_7] : memref<16x4xf32, #tpu.memory_space<vmem>>, vector<8x4xf32>
    %8 = arith.truncf %7 : vector<8x4xf32> to vector<8x4xbf16>
    %cst_8 = arith.constant dense<0.000000e+00> : vector<8x32xf32>
    %9 = tpu.matmul %8, %2, %cst_8 {dimension_numbers = #tpu.dot_dimension_numbers<[1], [0], [0], [1], [0, 0, 1, 1], [], []>} : vector<8x4xbf16>, vector<4x32xbf16>, vector<8x32xf32> -> vector<8x32xf32>
    %10 = arith.addf %9, %1 : vector<8x32xf32>
    %c0_9 = arith.constant 0 : index
    %c0_10 = arith.constant 0 : index
    %c0_11 = arith.constant 0 : index
    %11 = vector.load %arg4[%c0_9, %c0_10, %c0_11] : memref<2x32x96xbf16, #tpu.memory_space<vmem>>, vector<1x32x96xbf16>
    %12 = vector.shape_cast %11 : vector<1x32x96xbf16> to vector<32x96xbf16>
    %c0_12 = arith.constant 0 : index
    %c0_13 = arith.constant 0 : index
    %c0_14 = arith.constant 0 : index
    %13 = vector.load %arg5[%c0_12, %c0_13, %c0_14] : memref<2x1x96xf32, #tpu.memory_space<vmem>>, vector<1x1x96xf32>
    %14 = vector.shape_cast %13 : vector<1x1x96xf32> to vector<1x96xf32>
    %c0_15 = arith.constant 0 : index
    %c0_16 = arith.constant 0 : index
    %c0_17 = arith.constant 0 : index
    %15 = vector.load %arg6[%c0_15, %c0_16, %c0_17] : memref<2x32x32xbf16, #tpu.memory_space<vmem>>, vector<1x32x32xbf16>
    %16 = vector.shape_cast %15 : vector<1x32x32xbf16> to vector<32x32xbf16>
    %c0_18 = arith.constant 0 : index
    %c0_19 = arith.constant 0 : index
    %c0_20 = arith.constant 0 : index
    %17 = vector.load %arg7[%c0_18, %c0_19, %c0_20] : memref<2x1x32xf32, #tpu.memory_space<vmem>>, vector<1x1x32xf32>
    %18 = vector.shape_cast %17 : vector<1x1x32xf32> to vector<1x32xf32>
    %c0_21 = arith.constant 0 : index
    %c0_22 = arith.constant 0 : index
    %c0_23 = arith.constant 0 : index
    %19 = vector.load %arg12[%c0_21, %c0_22, %c0_23] : memref<2x32x256xbf16, #tpu.memory_space<vmem>>, vector<1x32x256xbf16>
    %20 = vector.shape_cast %19 : vector<1x32x256xbf16> to vector<32x256xbf16>
    %c0_24 = arith.constant 0 : index
    %c0_25 = arith.constant 0 : index
    %c0_26 = arith.constant 0 : index
    %21 = vector.load %arg13[%c0_24, %c0_25, %c0_26] : memref<2x1x256xf32, #tpu.memory_space<vmem>>, vector<1x1x256xf32>
    %22 = vector.shape_cast %21 : vector<1x1x256xf32> to vector<1x256xf32>
    %c0_27 = arith.constant 0 : index
    %c0_28 = arith.constant 0 : index
    %c0_29 = arith.constant 0 : index
    %23 = vector.load %arg14[%c0_27, %c0_28, %c0_29] : memref<2x256x32xbf16, #tpu.memory_space<vmem>>, vector<1x256x32xbf16>
    %24 = vector.shape_cast %23 : vector<1x256x32xbf16> to vector<256x32xbf16>
    %c0_30 = arith.constant 0 : index
    %c0_31 = arith.constant 0 : index
    %c0_32 = arith.constant 0 : index
    %25 = vector.load %arg15[%c0_30, %c0_31, %c0_32] : memref<2x1x32xf32, #tpu.memory_space<vmem>>, vector<1x1x32xf32>
    %26 = vector.shape_cast %25 : vector<1x1x32xf32> to vector<1x32xf32>
    %c0_33 = arith.constant 0 : index
    %c0_34 = arith.constant 0 : index
    %c0_35 = arith.constant 0 : index
    %27 = vector.load %arg8[%c0_33, %c0_34, %c0_35] : memref<2x1x32xf32, #tpu.memory_space<vmem>>, vector<1x1x32xf32>
    %28 = vector.shape_cast %27 : vector<1x1x32xf32> to vector<1x32xf32>
    %c0_36 = arith.constant 0 : index
    %c0_37 = arith.constant 0 : index
    %c0_38 = arith.constant 0 : index
    %29 = vector.load %arg9[%c0_36, %c0_37, %c0_38] : memref<2x1x32xf32, #tpu.memory_space<vmem>>, vector<1x1x32xf32>
    %30 = vector.shape_cast %29 : vector<1x1x32xf32> to vector<1x32xf32>
    %c0_39 = arith.constant 0 : index
    %c0_40 = arith.constant 0 : index
    %c0_41 = arith.constant 0 : index
    %31 = vector.load %arg10[%c0_39, %c0_40, %c0_41] : memref<2x1x32xf32, #tpu.memory_space<vmem>>, vector<1x1x32xf32>
    %32 = vector.shape_cast %31 : vector<1x1x32xf32> to vector<1x32xf32>
    %c0_42 = arith.constant 0 : index
    %c0_43 = arith.constant 0 : index
    %c0_44 = arith.constant 0 : index
    %33 = vector.load %arg11[%c0_42, %c0_43, %c0_44] : memref<2x1x32xf32, #tpu.memory_space<vmem>>, vector<1x1x32xf32>
    %34 = vector.shape_cast %33 : vector<1x1x32xf32> to vector<1x32xf32>
    %35 = arith.truncf %6 : vector<8x32xf32> to vector<8x32xbf16>
    %cst_45 = arith.constant dense<0.000000e+00> : vector<8x96xf32>
    %36 = tpu.matmul %35, %12, %cst_45 {dimension_numbers = #tpu.dot_dimension_numbers<[1], [0], [0], [1], [0, 0, 1, 1], [], []>} : vector<8x32xbf16>, vector<32x96xbf16>, vector<8x96xf32> -> vector<8x96xf32>
    %37 = vector.broadcast %14 : vector<1x96xf32> to vector<8x96xf32>
    %38 = arith.addf %36, %37 : vector<8x96xf32>
    %39 = arith.truncf %10 : vector<8x32xf32> to vector<8x32xbf16>
    %cst_46 = arith.constant dense<0.000000e+00> : vector<8x96xf32>
    %40 = tpu.matmul %39, %12, %cst_46 {dimension_numbers = #tpu.dot_dimension_numbers<[1], [0], [0], [1], [0, 0, 1, 1], [], []>} : vector<8x32xbf16>, vector<32x96xbf16>, vector<8x96xf32> -> vector<8x96xf32>
    %41 = vector.broadcast %14 : vector<1x96xf32> to vector<8x96xf32>
    %42 = arith.addf %40, %41 : vector<8x96xf32>
    %43 = vector.extract_strided_slice %38 {offsets = [0, 0], sizes = [8, 32], strides = [1, 1]} : vector<8x96xf32> to vector<8x32xf32>
    %44 = vector.extract_strided_slice %42 {offsets = [0, 0], sizes = [8, 32], strides = [1, 1]} : vector<8x96xf32> to vector<8x32xf32>
    %45 = vector.extract_strided_slice %38 {offsets = [0, 32], sizes = [8, 32], strides = [1, 1]} : vector<8x96xf32> to vector<8x32xf32>
    %46 = vector.extract_strided_slice %42 {offsets = [0, 32], sizes = [8, 32], strides = [1, 1]} : vector<8x96xf32> to vector<8x32xf32>
    %47 = vector.extract_strided_slice %38 {offsets = [0, 64], sizes = [8, 32], strides = [1, 1]} : vector<8x96xf32> to vector<8x32xf32>
    %48 = vector.extract_strided_slice %42 {offsets = [0, 64], sizes = [8, 32], strides = [1, 1]} : vector<8x96xf32> to vector<8x32xf32>
    %49 = arith.mulf %43, %45 : vector<8x32xf32>
    %50 = arith.truncf %49 : vector<8x32xf32> to vector<8x32xbf16>
    %cst_47 = arith.constant dense<0.000000e+00> : vector<8x32xf32>
    %51 = tpu.matmul %50, %0, %cst_47 {dimension_numbers = #tpu.dot_dimension_numbers<[1], [0], [0], [1], [0, 0, 1, 1], [], []>} : vector<8x32xbf16>, vector<32x32xbf16>, vector<8x32xf32> -> vector<8x32xf32>
    %cst_48 = arith.constant 1.000000e+00 : f32
    %52 = vector.broadcast %cst_48 : f32 to vector<8x32xf32>
    %53 = arith.mulf %43, %46 : vector<8x32xf32>
    %54 = arith.truncf %53 : vector<8x32xf32> to vector<8x32xbf16>
    %cst_49 = arith.constant dense<0.000000e+00> : vector<8x32xf32>
    %55 = tpu.matmul %54, %0, %cst_49 {dimension_numbers = #tpu.dot_dimension_numbers<[1], [0], [0], [1], [0, 0, 1, 1], [], []>} : vector<8x32xbf16>, vector<32x32xbf16>, vector<8x32xf32> -> vector<8x32xf32>
    %56 = arith.maximumf %51, %55 : vector<8x32xf32>
    %57 = arith.subf %51, %56 : vector<8x32xf32>
    %58 = math.exp %57 : vector<8x32xf32>
    %59 = arith.subf %55, %56 : vector<8x32xf32>
    %60 = math.exp %59 : vector<8x32xf32>
    %61 = arith.mulf %58, %52 : vector<8x32xf32>
    %62 = arith.addf %61, %60 : vector<8x32xf32>
    %63 = arith.mulf %58, %47 : vector<8x32xf32>
    %64 = arith.mulf %60, %48 : vector<8x32xf32>
    %65 = arith.addf %63, %64 : vector<8x32xf32>
    %66 = tpu.reciprocal %62 : vector<8x32xf32> -> vector<8x32xf32>
    %67 = arith.mulf %65, %66 : vector<8x32xf32>
    %68 = arith.truncf %67 : vector<8x32xf32> to vector<8x32xbf16>
    %cst_50 = arith.constant dense<0.000000e+00> : vector<8x32xf32>
    %69 = tpu.matmul %68, %16, %cst_50 {dimension_numbers = #tpu.dot_dimension_numbers<[1], [0], [0], [1], [0, 0, 1, 1], [], []>} : vector<8x32xbf16>, vector<32x32xbf16>, vector<8x32xf32> -> vector<8x32xf32>
    %70 = vector.broadcast %18 : vector<1x32xf32> to vector<8x32xf32>
    %71 = arith.addf %69, %70 : vector<8x32xf32>
    %72 = arith.addf %6, %71 : vector<8x32xf32>
    %cst_51 = arith.constant dense<0.000000e+00> : vector<8xf32>
    %73 = vector.multi_reduction <add>, %72, %cst_51 [1] : vector<8x32xf32> to vector<8xf32>
    %74 = vector.shape_cast %73 : vector<8xf32> to vector<8x1xf32>
    %cst_52 = arith.constant 3.200000e+01 : f32
    %75 = vector.broadcast %cst_52 : f32 to vector<8x1xf32>
    %76 = arith.divf %74, %75 : vector<8x1xf32>
    %77 = arith.mulf %72, %72 : vector<8x32xf32>
    %cst_53 = arith.constant dense<0.000000e+00> : vector<8xf32>
    %78 = vector.multi_reduction <add>, %77, %cst_53 [1] : vector<8x32xf32> to vector<8xf32>
    %79 = vector.shape_cast %78 : vector<8xf32> to vector<8x1xf32>
    %cst_54 = arith.constant 3.200000e+01 : f32
    %80 = vector.broadcast %cst_54 : f32 to vector<8x1xf32>
    %81 = arith.divf %79, %80 : vector<8x1xf32>
    %82 = arith.mulf %76, %76 : vector<8x1xf32>
    %83 = arith.subf %81, %82 : vector<8x1xf32>
    %84 = vector.broadcast %76 : vector<8x1xf32> to vector<8x32xf32>
    %85 = arith.subf %72, %84 : vector<8x32xf32>
    %cst_55 = arith.constant 9.99999974E-6 : f32
    %86 = vector.broadcast %cst_55 : f32 to vector<8x1xf32>
    %87 = arith.addf %83, %86 : vector<8x1xf32>
    %88 = math.rsqrt %87 : vector<8x1xf32>
    %89 = vector.broadcast %88 : vector<8x1xf32> to vector<8x32xf32>
    %90 = arith.mulf %85, %89 : vector<8x32xf32>
    %91 = vector.broadcast %28 : vector<1x32xf32> to vector<8x32xf32>
    %92 = arith.mulf %90, %91 : vector<8x32xf32>
    %93 = vector.broadcast %30 : vector<1x32xf32> to vector<8x32xf32>
    %94 = arith.addf %92, %93 : vector<8x32xf32>
    %95 = arith.truncf %94 : vector<8x32xf32> to vector<8x32xbf16>
    %cst_56 = arith.constant dense<0.000000e+00> : vector<8x256xf32>
    %96 = tpu.matmul %95, %20, %cst_56 {dimension_numbers = #tpu.dot_dimension_numbers<[1], [0], [0], [1], [0, 0, 1, 1], [], []>} : vector<8x32xbf16>, vector<32x256xbf16>, vector<8x256xf32> -> vector<8x256xf32>
    %97 = vector.broadcast %22 : vector<1x256xf32> to vector<8x256xf32>
    %98 = arith.addf %96, %97 : vector<8x256xf32>
    %cst_57 = arith.constant 0.000000e+00 : f32
    %99 = vector.broadcast %cst_57 : f32 to vector<8x256xf32>
    %100 = arith.maximumf %98, %99 : vector<8x256xf32>
    %101 = arith.truncf %100 : vector<8x256xf32> to vector<8x256xbf16>
    %cst_58 = arith.constant dense<0.000000e+00> : vector<8x32xf32>
    %102 = tpu.matmul %101, %24, %cst_58 {dimension_numbers = #tpu.dot_dimension_numbers<[1], [0], [0], [1], [0, 0, 1, 1], [], []>} : vector<8x256xbf16>, vector<256x32xbf16>, vector<8x32xf32> -> vector<8x32xf32>
    %103 = vector.broadcast %26 : vector<1x32xf32> to vector<8x32xf32>
    %104 = arith.addf %102, %103 : vector<8x32xf32>
    %105 = arith.addf %94, %104 : vector<8x32xf32>
    %cst_59 = arith.constant dense<0.000000e+00> : vector<8xf32>
    %106 = vector.multi_reduction <add>, %105, %cst_59 [1] : vector<8x32xf32> to vector<8xf32>
    %107 = vector.shape_cast %106 : vector<8xf32> to vector<8x1xf32>
    %cst_60 = arith.constant 3.200000e+01 : f32
    %108 = vector.broadcast %cst_60 : f32 to vector<8x1xf32>
    %109 = arith.divf %107, %108 : vector<8x1xf32>
    %110 = arith.mulf %105, %105 : vector<8x32xf32>
    %cst_61 = arith.constant dense<0.000000e+00> : vector<8xf32>
    %111 = vector.multi_reduction <add>, %110, %cst_61 [1] : vector<8x32xf32> to vector<8xf32>
    %112 = vector.shape_cast %111 : vector<8xf32> to vector<8x1xf32>
    %cst_62 = arith.constant 3.200000e+01 : f32
    %113 = vector.broadcast %cst_62 : f32 to vector<8x1xf32>
    %114 = arith.divf %112, %113 : vector<8x1xf32>
    %115 = arith.mulf %109, %109 : vector<8x1xf32>
    %116 = arith.subf %114, %115 : vector<8x1xf32>
    %117 = vector.broadcast %109 : vector<8x1xf32> to vector<8x32xf32>
    %118 = arith.subf %105, %117 : vector<8x32xf32>
    %cst_63 = arith.constant 9.99999974E-6 : f32
    %119 = vector.broadcast %cst_63 : f32 to vector<8x1xf32>
    %120 = arith.addf %116, %119 : vector<8x1xf32>
    %121 = math.rsqrt %120 : vector<8x1xf32>
    %122 = vector.broadcast %121 : vector<8x1xf32> to vector<8x32xf32>
    %123 = arith.mulf %118, %122 : vector<8x32xf32>
    %124 = vector.broadcast %32 : vector<1x32xf32> to vector<8x32xf32>
    %125 = arith.mulf %123, %124 : vector<8x32xf32>
    %126 = vector.broadcast %34 : vector<1x32xf32> to vector<8x32xf32>
    %127 = arith.addf %125, %126 : vector<8x32xf32>
    %128 = arith.mulf %44, %45 : vector<8x32xf32>
    %129 = arith.truncf %128 : vector<8x32xf32> to vector<8x32xbf16>
    %cst_64 = arith.constant dense<0.000000e+00> : vector<8x32xf32>
    %130 = tpu.matmul %129, %0, %cst_64 {dimension_numbers = #tpu.dot_dimension_numbers<[1], [0], [0], [1], [0, 0, 1, 1], [], []>} : vector<8x32xbf16>, vector<32x32xbf16>, vector<8x32xf32> -> vector<8x32xf32>
    %cst_65 = arith.constant 1.000000e+00 : f32
    %131 = vector.broadcast %cst_65 : f32 to vector<8x32xf32>
    %132 = arith.mulf %44, %46 : vector<8x32xf32>
    %133 = arith.truncf %132 : vector<8x32xf32> to vector<8x32xbf16>
    %cst_66 = arith.constant dense<0.000000e+00> : vector<8x32xf32>
    %134 = tpu.matmul %133, %0, %cst_66 {dimension_numbers = #tpu.dot_dimension_numbers<[1], [0], [0], [1], [0, 0, 1, 1], [], []>} : vector<8x32xbf16>, vector<32x32xbf16>, vector<8x32xf32> -> vector<8x32xf32>
    %135 = arith.maximumf %130, %134 : vector<8x32xf32>
    %136 = arith.subf %130, %135 : vector<8x32xf32>
    %137 = math.exp %136 : vector<8x32xf32>
    %138 = arith.subf %134, %135 : vector<8x32xf32>
    %139 = math.exp %138 : vector<8x32xf32>
    %140 = arith.mulf %137, %131 : vector<8x32xf32>
    %141 = arith.addf %140, %139 : vector<8x32xf32>
    %142 = arith.mulf %137, %47 : vector<8x32xf32>
    %143 = arith.mulf %139, %48 : vector<8x32xf32>
    %144 = arith.addf %142, %143 : vector<8x32xf32>
    %145 = tpu.reciprocal %141 : vector<8x32xf32> -> vector<8x32xf32>
    %146 = arith.mulf %144, %145 : vector<8x32xf32>
    %147 = arith.truncf %146 : vector<8x32xf32> to vector<8x32xbf16>
    %cst_67 = arith.constant dense<0.000000e+00> : vector<8x32xf32>
    %148 = tpu.matmul %147, %16, %cst_67 {dimension_numbers = #tpu.dot_dimension_numbers<[1], [0], [0], [1], [0, 0, 1, 1], [], []>} : vector<8x32xbf16>, vector<32x32xbf16>, vector<8x32xf32> -> vector<8x32xf32>
    %149 = vector.broadcast %18 : vector<1x32xf32> to vector<8x32xf32>
    %150 = arith.addf %148, %149 : vector<8x32xf32>
    %151 = arith.addf %10, %150 : vector<8x32xf32>
    %cst_68 = arith.constant dense<0.000000e+00> : vector<8xf32>
    %152 = vector.multi_reduction <add>, %151, %cst_68 [1] : vector<8x32xf32> to vector<8xf32>
    %153 = vector.shape_cast %152 : vector<8xf32> to vector<8x1xf32>
    %cst_69 = arith.constant 3.200000e+01 : f32
    %154 = vector.broadcast %cst_69 : f32 to vector<8x1xf32>
    %155 = arith.divf %153, %154 : vector<8x1xf32>
    %156 = arith.mulf %151, %151 : vector<8x32xf32>
    %cst_70 = arith.constant dense<0.000000e+00> : vector<8xf32>
    %157 = vector.multi_reduction <add>, %156, %cst_70 [1] : vector<8x32xf32> to vector<8xf32>
    %158 = vector.shape_cast %157 : vector<8xf32> to vector<8x1xf32>
    %cst_71 = arith.constant 3.200000e+01 : f32
    %159 = vector.broadcast %cst_71 : f32 to vector<8x1xf32>
    %160 = arith.divf %158, %159 : vector<8x1xf32>
    %161 = arith.mulf %155, %155 : vector<8x1xf32>
    %162 = arith.subf %160, %161 : vector<8x1xf32>
    %163 = vector.broadcast %155 : vector<8x1xf32> to vector<8x32xf32>
    %164 = arith.subf %151, %163 : vector<8x32xf32>
    %cst_72 = arith.constant 9.99999974E-6 : f32
    %165 = vector.broadcast %cst_72 : f32 to vector<8x1xf32>
    %166 = arith.addf %162, %165 : vector<8x1xf32>
    %167 = math.rsqrt %166 : vector<8x1xf32>
    %168 = vector.broadcast %167 : vector<8x1xf32> to vector<8x32xf32>
    %169 = arith.mulf %164, %168 : vector<8x32xf32>
    %170 = vector.broadcast %28 : vector<1x32xf32> to vector<8x32xf32>
    %171 = arith.mulf %169, %170 : vector<8x32xf32>
    %172 = vector.broadcast %30 : vector<1x32xf32> to vector<8x32xf32>
    %173 = arith.addf %171, %172 : vector<8x32xf32>
    %174 = arith.truncf %173 : vector<8x32xf32> to vector<8x32xbf16>
    %cst_73 = arith.constant dense<0.000000e+00> : vector<8x256xf32>
    %175 = tpu.matmul %174, %20, %cst_73 {dimension_numbers = #tpu.dot_dimension_numbers<[1], [0], [0], [1], [0, 0, 1, 1], [], []>} : vector<8x32xbf16>, vector<32x256xbf16>, vector<8x256xf32> -> vector<8x256xf32>
    %176 = vector.broadcast %22 : vector<1x256xf32> to vector<8x256xf32>
    %177 = arith.addf %175, %176 : vector<8x256xf32>
    %cst_74 = arith.constant 0.000000e+00 : f32
    %178 = vector.broadcast %cst_74 : f32 to vector<8x256xf32>
    %179 = arith.maximumf %177, %178 : vector<8x256xf32>
    %180 = arith.truncf %179 : vector<8x256xf32> to vector<8x256xbf16>
    %cst_75 = arith.constant dense<0.000000e+00> : vector<8x32xf32>
    %181 = tpu.matmul %180, %24, %cst_75 {dimension_numbers = #tpu.dot_dimension_numbers<[1], [0], [0], [1], [0, 0, 1, 1], [], []>} : vector<8x256xbf16>, vector<256x32xbf16>, vector<8x32xf32> -> vector<8x32xf32>
    %182 = vector.broadcast %26 : vector<1x32xf32> to vector<8x32xf32>
    %183 = arith.addf %181, %182 : vector<8x32xf32>
    %184 = arith.addf %173, %183 : vector<8x32xf32>
    %cst_76 = arith.constant dense<0.000000e+00> : vector<8xf32>
    %185 = vector.multi_reduction <add>, %184, %cst_76 [1] : vector<8x32xf32> to vector<8xf32>
    %186 = vector.shape_cast %185 : vector<8xf32> to vector<8x1xf32>
    %cst_77 = arith.constant 3.200000e+01 : f32
    %187 = vector.broadcast %cst_77 : f32 to vector<8x1xf32>
    %188 = arith.divf %186, %187 : vector<8x1xf32>
    %189 = arith.mulf %184, %184 : vector<8x32xf32>
    %cst_78 = arith.constant dense<0.000000e+00> : vector<8xf32>
    %190 = vector.multi_reduction <add>, %189, %cst_78 [1] : vector<8x32xf32> to vector<8xf32>
    %191 = vector.shape_cast %190 : vector<8xf32> to vector<8x1xf32>
    %cst_79 = arith.constant 3.200000e+01 : f32
    %192 = vector.broadcast %cst_79 : f32 to vector<8x1xf32>
    %193 = arith.divf %191, %192 : vector<8x1xf32>
    %194 = arith.mulf %188, %188 : vector<8x1xf32>
    %195 = arith.subf %193, %194 : vector<8x1xf32>
    %196 = vector.broadcast %188 : vector<8x1xf32> to vector<8x32xf32>
    %197 = arith.subf %184, %196 : vector<8x32xf32>
    %cst_80 = arith.constant 9.99999974E-6 : f32
    %198 = vector.broadcast %cst_80 : f32 to vector<8x1xf32>
    %199 = arith.addf %195, %198 : vector<8x1xf32>
    %200 = math.rsqrt %199 : vector<8x1xf32>
    %201 = vector.broadcast %200 : vector<8x1xf32> to vector<8x32xf32>
    %202 = arith.mulf %197, %201 : vector<8x32xf32>
    %203 = vector.broadcast %32 : vector<1x32xf32> to vector<8x32xf32>
    %204 = arith.mulf %202, %203 : vector<8x32xf32>
    %205 = vector.broadcast %34 : vector<1x32xf32> to vector<8x32xf32>
    %206 = arith.addf %204, %205 : vector<8x32xf32>
    %c1 = arith.constant 1 : index
    %c0_81 = arith.constant 0 : index
    %c0_82 = arith.constant 0 : index
    %207 = vector.load %arg4[%c1, %c0_81, %c0_82] : memref<2x32x96xbf16, #tpu.memory_space<vmem>>, vector<1x32x96xbf16>
    %208 = vector.shape_cast %207 : vector<1x32x96xbf16> to vector<32x96xbf16>
    %c1_83 = arith.constant 1 : index
    %c0_84 = arith.constant 0 : index
    %c0_85 = arith.constant 0 : index
    %209 = vector.load %arg5[%c1_83, %c0_84, %c0_85] : memref<2x1x96xf32, #tpu.memory_space<vmem>>, vector<1x1x96xf32>
    %210 = vector.shape_cast %209 : vector<1x1x96xf32> to vector<1x96xf32>
    %c1_86 = arith.constant 1 : index
    %c0_87 = arith.constant 0 : index
    %c0_88 = arith.constant 0 : index
    %211 = vector.load %arg6[%c1_86, %c0_87, %c0_88] : memref<2x32x32xbf16, #tpu.memory_space<vmem>>, vector<1x32x32xbf16>
    %212 = vector.shape_cast %211 : vector<1x32x32xbf16> to vector<32x32xbf16>
    %c1_89 = arith.constant 1 : index
    %c0_90 = arith.constant 0 : index
    %c0_91 = arith.constant 0 : index
    %213 = vector.load %arg7[%c1_89, %c0_90, %c0_91] : memref<2x1x32xf32, #tpu.memory_space<vmem>>, vector<1x1x32xf32>
    %214 = vector.shape_cast %213 : vector<1x1x32xf32> to vector<1x32xf32>
    %c1_92 = arith.constant 1 : index
    %c0_93 = arith.constant 0 : index
    %c0_94 = arith.constant 0 : index
    %215 = vector.load %arg12[%c1_92, %c0_93, %c0_94] : memref<2x32x256xbf16, #tpu.memory_space<vmem>>, vector<1x32x256xbf16>
    %216 = vector.shape_cast %215 : vector<1x32x256xbf16> to vector<32x256xbf16>
    %c1_95 = arith.constant 1 : index
    %c0_96 = arith.constant 0 : index
    %c0_97 = arith.constant 0 : index
    %217 = vector.load %arg13[%c1_95, %c0_96, %c0_97] : memref<2x1x256xf32, #tpu.memory_space<vmem>>, vector<1x1x256xf32>
    %218 = vector.shape_cast %217 : vector<1x1x256xf32> to vector<1x256xf32>
    %c1_98 = arith.constant 1 : index
    %c0_99 = arith.constant 0 : index
    %c0_100 = arith.constant 0 : index
    %219 = vector.load %arg14[%c1_98, %c0_99, %c0_100] : memref<2x256x32xbf16, #tpu.memory_space<vmem>>, vector<1x256x32xbf16>
    %220 = vector.shape_cast %219 : vector<1x256x32xbf16> to vector<256x32xbf16>
    %c1_101 = arith.constant 1 : index
    %c0_102 = arith.constant 0 : index
    %c0_103 = arith.constant 0 : index
    %221 = vector.load %arg15[%c1_101, %c0_102, %c0_103] : memref<2x1x32xf32, #tpu.memory_space<vmem>>, vector<1x1x32xf32>
    %222 = vector.shape_cast %221 : vector<1x1x32xf32> to vector<1x32xf32>
    %c1_104 = arith.constant 1 : index
    %c0_105 = arith.constant 0 : index
    %c0_106 = arith.constant 0 : index
    %223 = vector.load %arg8[%c1_104, %c0_105, %c0_106] : memref<2x1x32xf32, #tpu.memory_space<vmem>>, vector<1x1x32xf32>
    %224 = vector.shape_cast %223 : vector<1x1x32xf32> to vector<1x32xf32>
    %c1_107 = arith.constant 1 : index
    %c0_108 = arith.constant 0 : index
    %c0_109 = arith.constant 0 : index
    %225 = vector.load %arg9[%c1_107, %c0_108, %c0_109] : memref<2x1x32xf32, #tpu.memory_space<vmem>>, vector<1x1x32xf32>
    %226 = vector.shape_cast %225 : vector<1x1x32xf32> to vector<1x32xf32>
    %c1_110 = arith.constant 1 : index
    %c0_111 = arith.constant 0 : index
    %c0_112 = arith.constant 0 : index
    %227 = vector.load %arg10[%c1_110, %c0_111, %c0_112] : memref<2x1x32xf32, #tpu.memory_space<vmem>>, vector<1x1x32xf32>
    %228 = vector.shape_cast %227 : vector<1x1x32xf32> to vector<1x32xf32>
    %c1_113 = arith.constant 1 : index
    %c0_114 = arith.constant 0 : index
    %c0_115 = arith.constant 0 : index
    %229 = vector.load %arg11[%c1_113, %c0_114, %c0_115] : memref<2x1x32xf32, #tpu.memory_space<vmem>>, vector<1x1x32xf32>
    %230 = vector.shape_cast %229 : vector<1x1x32xf32> to vector<1x32xf32>
    %231 = arith.truncf %127 : vector<8x32xf32> to vector<8x32xbf16>
    %cst_116 = arith.constant dense<0.000000e+00> : vector<8x96xf32>
    %232 = tpu.matmul %231, %208, %cst_116 {dimension_numbers = #tpu.dot_dimension_numbers<[1], [0], [0], [1], [0, 0, 1, 1], [], []>} : vector<8x32xbf16>, vector<32x96xbf16>, vector<8x96xf32> -> vector<8x96xf32>
    %233 = vector.broadcast %210 : vector<1x96xf32> to vector<8x96xf32>
    %234 = arith.addf %232, %233 : vector<8x96xf32>
    %235 = arith.truncf %206 : vector<8x32xf32> to vector<8x32xbf16>
    %cst_117 = arith.constant dense<0.000000e+00> : vector<8x96xf32>
    %236 = tpu.matmul %235, %208, %cst_117 {dimension_numbers = #tpu.dot_dimension_numbers<[1], [0], [0], [1], [0, 0, 1, 1], [], []>} : vector<8x32xbf16>, vector<32x96xbf16>, vector<8x96xf32> -> vector<8x96xf32>
    %237 = vector.broadcast %210 : vector<1x96xf32> to vector<8x96xf32>
    %238 = arith.addf %236, %237 : vector<8x96xf32>
    %239 = vector.extract_strided_slice %234 {offsets = [0, 0], sizes = [8, 32], strides = [1, 1]} : vector<8x96xf32> to vector<8x32xf32>
    %240 = vector.extract_strided_slice %238 {offsets = [0, 0], sizes = [8, 32], strides = [1, 1]} : vector<8x96xf32> to vector<8x32xf32>
    %241 = vector.extract_strided_slice %234 {offsets = [0, 32], sizes = [8, 32], strides = [1, 1]} : vector<8x96xf32> to vector<8x32xf32>
    %242 = vector.extract_strided_slice %238 {offsets = [0, 32], sizes = [8, 32], strides = [1, 1]} : vector<8x96xf32> to vector<8x32xf32>
    %243 = vector.extract_strided_slice %234 {offsets = [0, 64], sizes = [8, 32], strides = [1, 1]} : vector<8x96xf32> to vector<8x32xf32>
    %244 = vector.extract_strided_slice %238 {offsets = [0, 64], sizes = [8, 32], strides = [1, 1]} : vector<8x96xf32> to vector<8x32xf32>
    %245 = arith.mulf %239, %241 : vector<8x32xf32>
    %246 = arith.truncf %245 : vector<8x32xf32> to vector<8x32xbf16>
    %cst_118 = arith.constant dense<0.000000e+00> : vector<8x32xf32>
    %247 = tpu.matmul %246, %0, %cst_118 {dimension_numbers = #tpu.dot_dimension_numbers<[1], [0], [0], [1], [0, 0, 1, 1], [], []>} : vector<8x32xbf16>, vector<32x32xbf16>, vector<8x32xf32> -> vector<8x32xf32>
    %cst_119 = arith.constant 1.000000e+00 : f32
    %248 = vector.broadcast %cst_119 : f32 to vector<8x32xf32>
    %249 = arith.mulf %239, %242 : vector<8x32xf32>
    %250 = arith.truncf %249 : vector<8x32xf32> to vector<8x32xbf16>
    %cst_120 = arith.constant dense<0.000000e+00> : vector<8x32xf32>
    %251 = tpu.matmul %250, %0, %cst_120 {dimension_numbers = #tpu.dot_dimension_numbers<[1], [0], [0], [1], [0, 0, 1, 1], [], []>} : vector<8x32xbf16>, vector<32x32xbf16>, vector<8x32xf32> -> vector<8x32xf32>
    %252 = arith.maximumf %247, %251 : vector<8x32xf32>
    %253 = arith.subf %247, %252 : vector<8x32xf32>
    %254 = math.exp %253 : vector<8x32xf32>
    %255 = arith.subf %251, %252 : vector<8x32xf32>
    %256 = math.exp %255 : vector<8x32xf32>
    %257 = arith.mulf %254, %248 : vector<8x32xf32>
    %258 = arith.addf %257, %256 : vector<8x32xf32>
    %259 = arith.mulf %254, %243 : vector<8x32xf32>
    %260 = arith.mulf %256, %244 : vector<8x32xf32>
    %261 = arith.addf %259, %260 : vector<8x32xf32>
    %262 = tpu.reciprocal %258 : vector<8x32xf32> -> vector<8x32xf32>
    %263 = arith.mulf %261, %262 : vector<8x32xf32>
    %264 = arith.truncf %263 : vector<8x32xf32> to vector<8x32xbf16>
    %cst_121 = arith.constant dense<0.000000e+00> : vector<8x32xf32>
    %265 = tpu.matmul %264, %212, %cst_121 {dimension_numbers = #tpu.dot_dimension_numbers<[1], [0], [0], [1], [0, 0, 1, 1], [], []>} : vector<8x32xbf16>, vector<32x32xbf16>, vector<8x32xf32> -> vector<8x32xf32>
    %266 = vector.broadcast %214 : vector<1x32xf32> to vector<8x32xf32>
    %267 = arith.addf %265, %266 : vector<8x32xf32>
    %268 = arith.addf %127, %267 : vector<8x32xf32>
    %cst_122 = arith.constant dense<0.000000e+00> : vector<8xf32>
    %269 = vector.multi_reduction <add>, %268, %cst_122 [1] : vector<8x32xf32> to vector<8xf32>
    %270 = vector.shape_cast %269 : vector<8xf32> to vector<8x1xf32>
    %cst_123 = arith.constant 3.200000e+01 : f32
    %271 = vector.broadcast %cst_123 : f32 to vector<8x1xf32>
    %272 = arith.divf %270, %271 : vector<8x1xf32>
    %273 = arith.mulf %268, %268 : vector<8x32xf32>
    %cst_124 = arith.constant dense<0.000000e+00> : vector<8xf32>
    %274 = vector.multi_reduction <add>, %273, %cst_124 [1] : vector<8x32xf32> to vector<8xf32>
    %275 = vector.shape_cast %274 : vector<8xf32> to vector<8x1xf32>
    %cst_125 = arith.constant 3.200000e+01 : f32
    %276 = vector.broadcast %cst_125 : f32 to vector<8x1xf32>
    %277 = arith.divf %275, %276 : vector<8x1xf32>
    %278 = arith.mulf %272, %272 : vector<8x1xf32>
    %279 = arith.subf %277, %278 : vector<8x1xf32>
    %280 = vector.broadcast %272 : vector<8x1xf32> to vector<8x32xf32>
    %281 = arith.subf %268, %280 : vector<8x32xf32>
    %cst_126 = arith.constant 9.99999974E-6 : f32
    %282 = vector.broadcast %cst_126 : f32 to vector<8x1xf32>
    %283 = arith.addf %279, %282 : vector<8x1xf32>
    %284 = math.rsqrt %283 : vector<8x1xf32>
    %285 = vector.broadcast %284 : vector<8x1xf32> to vector<8x32xf32>
    %286 = arith.mulf %281, %285 : vector<8x32xf32>
    %287 = vector.broadcast %224 : vector<1x32xf32> to vector<8x32xf32>
    %288 = arith.mulf %286, %287 : vector<8x32xf32>
    %289 = vector.broadcast %226 : vector<1x32xf32> to vector<8x32xf32>
    %290 = arith.addf %288, %289 : vector<8x32xf32>
    %291 = arith.truncf %290 : vector<8x32xf32> to vector<8x32xbf16>
    %cst_127 = arith.constant dense<0.000000e+00> : vector<8x256xf32>
    %292 = tpu.matmul %291, %216, %cst_127 {dimension_numbers = #tpu.dot_dimension_numbers<[1], [0], [0], [1], [0, 0, 1, 1], [], []>} : vector<8x32xbf16>, vector<32x256xbf16>, vector<8x256xf32> -> vector<8x256xf32>
    %293 = vector.broadcast %218 : vector<1x256xf32> to vector<8x256xf32>
    %294 = arith.addf %292, %293 : vector<8x256xf32>
    %cst_128 = arith.constant 0.000000e+00 : f32
    %295 = vector.broadcast %cst_128 : f32 to vector<8x256xf32>
    %296 = arith.maximumf %294, %295 : vector<8x256xf32>
    %297 = arith.truncf %296 : vector<8x256xf32> to vector<8x256xbf16>
    %cst_129 = arith.constant dense<0.000000e+00> : vector<8x32xf32>
    %298 = tpu.matmul %297, %220, %cst_129 {dimension_numbers = #tpu.dot_dimension_numbers<[1], [0], [0], [1], [0, 0, 1, 1], [], []>} : vector<8x256xbf16>, vector<256x32xbf16>, vector<8x32xf32> -> vector<8x32xf32>
    %299 = vector.broadcast %222 : vector<1x32xf32> to vector<8x32xf32>
    %300 = arith.addf %298, %299 : vector<8x32xf32>
    %301 = arith.addf %290, %300 : vector<8x32xf32>
    %cst_130 = arith.constant dense<0.000000e+00> : vector<8xf32>
    %302 = vector.multi_reduction <add>, %301, %cst_130 [1] : vector<8x32xf32> to vector<8xf32>
    %303 = vector.shape_cast %302 : vector<8xf32> to vector<8x1xf32>
    %cst_131 = arith.constant 3.200000e+01 : f32
    %304 = vector.broadcast %cst_131 : f32 to vector<8x1xf32>
    %305 = arith.divf %303, %304 : vector<8x1xf32>
    %306 = arith.mulf %301, %301 : vector<8x32xf32>
    %cst_132 = arith.constant dense<0.000000e+00> : vector<8xf32>
    %307 = vector.multi_reduction <add>, %306, %cst_132 [1] : vector<8x32xf32> to vector<8xf32>
    %308 = vector.shape_cast %307 : vector<8xf32> to vector<8x1xf32>
    %cst_133 = arith.constant 3.200000e+01 : f32
    %309 = vector.broadcast %cst_133 : f32 to vector<8x1xf32>
    %310 = arith.divf %308, %309 : vector<8x1xf32>
    %311 = arith.mulf %305, %305 : vector<8x1xf32>
    %312 = arith.subf %310, %311 : vector<8x1xf32>
    %313 = vector.broadcast %305 : vector<8x1xf32> to vector<8x32xf32>
    %314 = arith.subf %301, %313 : vector<8x32xf32>
    %cst_134 = arith.constant 9.99999974E-6 : f32
    %315 = vector.broadcast %cst_134 : f32 to vector<8x1xf32>
    %316 = arith.addf %312, %315 : vector<8x1xf32>
    %317 = math.rsqrt %316 : vector<8x1xf32>
    %318 = vector.broadcast %317 : vector<8x1xf32> to vector<8x32xf32>
    %319 = arith.mulf %314, %318 : vector<8x32xf32>
    %320 = vector.broadcast %228 : vector<1x32xf32> to vector<8x32xf32>
    %321 = arith.mulf %319, %320 : vector<8x32xf32>
    %322 = vector.broadcast %230 : vector<1x32xf32> to vector<8x32xf32>
    %323 = arith.addf %321, %322 : vector<8x32xf32>
    %324 = arith.mulf %240, %241 : vector<8x32xf32>
    %325 = arith.truncf %324 : vector<8x32xf32> to vector<8x32xbf16>
    %cst_135 = arith.constant dense<0.000000e+00> : vector<8x32xf32>
    %326 = tpu.matmul %325, %0, %cst_135 {dimension_numbers = #tpu.dot_dimension_numbers<[1], [0], [0], [1], [0, 0, 1, 1], [], []>} : vector<8x32xbf16>, vector<32x32xbf16>, vector<8x32xf32> -> vector<8x32xf32>
    %cst_136 = arith.constant 1.000000e+00 : f32
    %327 = vector.broadcast %cst_136 : f32 to vector<8x32xf32>
    %328 = arith.mulf %240, %242 : vector<8x32xf32>
    %329 = arith.truncf %328 : vector<8x32xf32> to vector<8x32xbf16>
    %cst_137 = arith.constant dense<0.000000e+00> : vector<8x32xf32>
    %330 = tpu.matmul %329, %0, %cst_137 {dimension_numbers = #tpu.dot_dimension_numbers<[1], [0], [0], [1], [0, 0, 1, 1], [], []>} : vector<8x32xbf16>, vector<32x32xbf16>, vector<8x32xf32> -> vector<8x32xf32>
    %331 = arith.maximumf %326, %330 : vector<8x32xf32>
    %332 = arith.subf %326, %331 : vector<8x32xf32>
    %333 = math.exp %332 : vector<8x32xf32>
    %334 = arith.subf %330, %331 : vector<8x32xf32>
    %335 = math.exp %334 : vector<8x32xf32>
    %336 = arith.mulf %333, %327 : vector<8x32xf32>
    %337 = arith.addf %336, %335 : vector<8x32xf32>
    %338 = arith.mulf %333, %243 : vector<8x32xf32>
    %339 = arith.mulf %335, %244 : vector<8x32xf32>
    %340 = arith.addf %338, %339 : vector<8x32xf32>
    %341 = tpu.reciprocal %337 : vector<8x32xf32> -> vector<8x32xf32>
    %342 = arith.mulf %340, %341 : vector<8x32xf32>
    %343 = arith.truncf %342 : vector<8x32xf32> to vector<8x32xbf16>
    %cst_138 = arith.constant dense<0.000000e+00> : vector<8x32xf32>
    %344 = tpu.matmul %343, %212, %cst_138 {dimension_numbers = #tpu.dot_dimension_numbers<[1], [0], [0], [1], [0, 0, 1, 1], [], []>} : vector<8x32xbf16>, vector<32x32xbf16>, vector<8x32xf32> -> vector<8x32xf32>
    %345 = vector.broadcast %214 : vector<1x32xf32> to vector<8x32xf32>
    %346 = arith.addf %344, %345 : vector<8x32xf32>
    %347 = arith.addf %206, %346 : vector<8x32xf32>
    %cst_139 = arith.constant dense<0.000000e+00> : vector<8xf32>
    %348 = vector.multi_reduction <add>, %347, %cst_139 [1] : vector<8x32xf32> to vector<8xf32>
    %349 = vector.shape_cast %348 : vector<8xf32> to vector<8x1xf32>
    %cst_140 = arith.constant 3.200000e+01 : f32
    %350 = vector.broadcast %cst_140 : f32 to vector<8x1xf32>
    %351 = arith.divf %349, %350 : vector<8x1xf32>
    %352 = arith.mulf %347, %347 : vector<8x32xf32>
    %cst_141 = arith.constant dense<0.000000e+00> : vector<8xf32>
    %353 = vector.multi_reduction <add>, %352, %cst_141 [1] : vector<8x32xf32> to vector<8xf32>
    %354 = vector.shape_cast %353 : vector<8xf32> to vector<8x1xf32>
    %cst_142 = arith.constant 3.200000e+01 : f32
    %355 = vector.broadcast %cst_142 : f32 to vector<8x1xf32>
    %356 = arith.divf %354, %355 : vector<8x1xf32>
    %357 = arith.mulf %351, %351 : vector<8x1xf32>
    %358 = arith.subf %356, %357 : vector<8x1xf32>
    %359 = vector.broadcast %351 : vector<8x1xf32> to vector<8x32xf32>
    %360 = arith.subf %347, %359 : vector<8x32xf32>
    %cst_143 = arith.constant 9.99999974E-6 : f32
    %361 = vector.broadcast %cst_143 : f32 to vector<8x1xf32>
    %362 = arith.addf %358, %361 : vector<8x1xf32>
    %363 = math.rsqrt %362 : vector<8x1xf32>
    %364 = vector.broadcast %363 : vector<8x1xf32> to vector<8x32xf32>
    %365 = arith.mulf %360, %364 : vector<8x32xf32>
    %366 = vector.broadcast %224 : vector<1x32xf32> to vector<8x32xf32>
    %367 = arith.mulf %365, %366 : vector<8x32xf32>
    %368 = vector.broadcast %226 : vector<1x32xf32> to vector<8x32xf32>
    %369 = arith.addf %367, %368 : vector<8x32xf32>
    %370 = arith.truncf %369 : vector<8x32xf32> to vector<8x32xbf16>
    %cst_144 = arith.constant dense<0.000000e+00> : vector<8x256xf32>
    %371 = tpu.matmul %370, %216, %cst_144 {dimension_numbers = #tpu.dot_dimension_numbers<[1], [0], [0], [1], [0, 0, 1, 1], [], []>} : vector<8x32xbf16>, vector<32x256xbf16>, vector<8x256xf32> -> vector<8x256xf32>
    %372 = vector.broadcast %218 : vector<1x256xf32> to vector<8x256xf32>
    %373 = arith.addf %371, %372 : vector<8x256xf32>
    %cst_145 = arith.constant 0.000000e+00 : f32
    %374 = vector.broadcast %cst_145 : f32 to vector<8x256xf32>
    %375 = arith.maximumf %373, %374 : vector<8x256xf32>
    %376 = arith.truncf %375 : vector<8x256xf32> to vector<8x256xbf16>
    %cst_146 = arith.constant dense<0.000000e+00> : vector<8x32xf32>
    %377 = tpu.matmul %376, %220, %cst_146 {dimension_numbers = #tpu.dot_dimension_numbers<[1], [0], [0], [1], [0, 0, 1, 1], [], []>} : vector<8x256xbf16>, vector<256x32xbf16>, vector<8x32xf32> -> vector<8x32xf32>
    %378 = vector.broadcast %222 : vector<1x32xf32> to vector<8x32xf32>
    %379 = arith.addf %377, %378 : vector<8x32xf32>
    %380 = arith.addf %369, %379 : vector<8x32xf32>
    %cst_147 = arith.constant dense<0.000000e+00> : vector<8xf32>
    %381 = vector.multi_reduction <add>, %380, %cst_147 [1] : vector<8x32xf32> to vector<8xf32>
    %382 = vector.shape_cast %381 : vector<8xf32> to vector<8x1xf32>
    %cst_148 = arith.constant 3.200000e+01 : f32
    %383 = vector.broadcast %cst_148 : f32 to vector<8x1xf32>
    %384 = arith.divf %382, %383 : vector<8x1xf32>
    %385 = arith.mulf %380, %380 : vector<8x32xf32>
    %cst_149 = arith.constant dense<0.000000e+00> : vector<8xf32>
    %386 = vector.multi_reduction <add>, %385, %cst_149 [1] : vector<8x32xf32> to vector<8xf32>
    %387 = vector.shape_cast %386 : vector<8xf32> to vector<8x1xf32>
    %cst_150 = arith.constant 3.200000e+01 : f32
    %388 = vector.broadcast %cst_150 : f32 to vector<8x1xf32>
    %389 = arith.divf %387, %388 : vector<8x1xf32>
    %390 = arith.mulf %384, %384 : vector<8x1xf32>
    %391 = arith.subf %389, %390 : vector<8x1xf32>
    %392 = vector.broadcast %384 : vector<8x1xf32> to vector<8x32xf32>
    %393 = arith.subf %380, %392 : vector<8x32xf32>
    %cst_151 = arith.constant 9.99999974E-6 : f32
    %394 = vector.broadcast %cst_151 : f32 to vector<8x1xf32>
    %395 = arith.addf %391, %394 : vector<8x1xf32>
    %396 = math.rsqrt %395 : vector<8x1xf32>
    %397 = vector.broadcast %396 : vector<8x1xf32> to vector<8x32xf32>
    %398 = arith.mulf %393, %397 : vector<8x32xf32>
    %399 = vector.broadcast %228 : vector<1x32xf32> to vector<8x32xf32>
    %400 = arith.mulf %398, %399 : vector<8x32xf32>
    %401 = vector.broadcast %230 : vector<1x32xf32> to vector<8x32xf32>
    %402 = arith.addf %400, %401 : vector<8x32xf32>
    %c0_152 = arith.constant 0 : index
    %c0_153 = arith.constant 0 : index
    %403 = vector.load %arg16[%c0_152, %c0_153] : memref<32x128xbf16, #tpu.memory_space<vmem>>, vector<32x128xbf16>
    %c0_154 = arith.constant 0 : index
    %c0_155 = arith.constant 0 : index
    %404 = vector.load %arg17[%c0_154, %c0_155] : memref<1x128xf32, #tpu.memory_space<vmem>>, vector<1x128xf32>
    %405 = arith.truncf %323 : vector<8x32xf32> to vector<8x32xbf16>
    %cst_156 = arith.constant dense<0.000000e+00> : vector<8x128xf32>
    %406 = tpu.matmul %405, %403, %cst_156 {dimension_numbers = #tpu.dot_dimension_numbers<[1], [0], [0], [1], [0, 0, 1, 1], [], []>} : vector<8x32xbf16>, vector<32x128xbf16>, vector<8x128xf32> -> vector<8x128xf32>
    %407 = vector.broadcast %404 : vector<1x128xf32> to vector<8x128xf32>
    %408 = arith.addf %406, %407 : vector<8x128xf32>
    %c0_157 = arith.constant 0 : index
    %c0_158 = arith.constant 0 : index
    %409 = vector.load %arg18[%c0_157, %c0_158] : memref<16x128xf32, #tpu.memory_space<vmem>>, vector<8x128xf32>
    tpu.vector_store %arg18[%c0_157, %c0_158], %408 {strides = array<i32>} : memref<16x128xf32, #tpu.memory_space<vmem>>, vector<8x128xf32>,
    %410 = arith.truncf %402 : vector<8x32xf32> to vector<8x32xbf16>
    %cst_159 = arith.constant dense<0.000000e+00> : vector<8x128xf32>
    %411 = tpu.matmul %410, %403, %cst_159 {dimension_numbers = #tpu.dot_dimension_numbers<[1], [0], [0], [1], [0, 0, 1, 1], [], []>} : vector<8x32xbf16>, vector<32x128xbf16>, vector<8x128xf32> -> vector<8x128xf32>
    %412 = vector.broadcast %404 : vector<1x128xf32> to vector<8x128xf32>
    %413 = arith.addf %411, %412 : vector<8x128xf32>
    %c8_160 = arith.constant 8 : index
    %c0_161 = arith.constant 0 : index
    %414 = vector.load %arg18[%c8_160, %c0_161] : memref<16x128xf32, #tpu.memory_space<vmem>>, vector<8x128xf32>
    tpu.vector_store %arg18[%c8_160, %c0_161], %413 {strides = array<i32>} : memref<16x128xf32, #tpu.memory_space<vmem>>, vector<8x128xf32>,
    return
  }
}

</mosaic_0001>

<llo_original>
// kernel: tpu_custom_call.1
$region0: #{tpu_custom_call.1}
  #allocation0 [shape = 'u32[]', space=smem, size = 0x4, offset = 0x4, fixed_abs, tag = 'smem constant byte address 0x4 - core index']
  #allocation1 [shape = 'u32[72,128]{1,0:T(1,128)}', space=vmem, size = 0x9000, scoped, tag = 'internal scratch']
  %s0 = inlined_call_operand.vmem [shape: f32[16,4], index: 0, kind: input, shape index: {}]
  %s1 = inlined_call_operand.vmem [shape: f32[8,32], index: 1, kind: input, shape index: {}]
  %s2 = inlined_call_operand.vmem [shape: bf16[32,32], index: 2, kind: input, shape index: {}]
  %s3 = inlined_call_operand.vmem [shape: bf16[4,32], index: 3, kind: input, shape index: {}]
  %s4 = inlined_call_operand.vmem [shape: bf16[2,32,96], index: 4, kind: input, shape index: {}]
  %s5 = inlined_call_operand.vmem [shape: f32[2,1,96], index: 5, kind: input, shape index: {}]
  %s6 = inlined_call_operand.vmem [shape: bf16[2,32,32], index: 6, kind: input, shape index: {}]
  %s7 = inlined_call_operand.vmem [shape: f32[2,1,32], index: 7, kind: input, shape index: {}]
  %s8 = inlined_call_operand.vmem [shape: f32[2,1,32], index: 8, kind: input, shape index: {}]
  %s9 = inlined_call_operand.vmem [shape: f32[2,1,32], index: 9, kind: input, shape index: {}]
  %s10 = inlined_call_operand.vmem [shape: f32[2,1,32], index: 10, kind: input, shape index: {}]
  %s11 = inlined_call_operand.vmem [shape: f32[2,1,32], index: 11, kind: input, shape index: {}]
  %s12 = inlined_call_operand.vmem [shape: bf16[2,32,256], index: 12, kind: input, shape index: {}]
  %s13 = inlined_call_operand.vmem [shape: f32[2,1,256], index: 13, kind: input, shape index: {}]
  %s14 = inlined_call_operand.vmem [shape: bf16[2,256,32], index: 14, kind: input, shape index: {}]
  %s15 = inlined_call_operand.vmem [shape: f32[2,1,32], index: 15, kind: input, shape index: {}]
  %s16 = inlined_call_operand.vmem [shape: bf16[32,128], index: 16, kind: input, shape index: {}]
  %s17 = inlined_call_operand.vmem [shape: f32[1,128], index: 17, kind: input, shape index: {}]
  %s18 = inlined_call_operand.hbm [shape: f32[16,128], index: 18, kind: output, shape index: {}]
  %s19 = sld [smem:[#allocation0]]
  $region82: #{tpu_custom_call.1} parent=0
    _
  %s21 = ssub.s32 1, %s19
  %s22 = scalar_select 0, %s21, %s19
  $region1: #{tpu_custom_call.1} parent=0
    #allocation2 [shape = 'u8[8192]{0}', space=vmem, size = 0x2000, scoped, tag = 'output window, operand 0, single buffered']
    #allocation3 [shape = 's32[1]{0}', space=sflag, size = 0x4, scoped, tag = 'scoped memory for tpu_custom_call.1']
    %23 = vsyncpa [#allocation3], 0
    // Predicated region
    $region2: #{tpu_custom_call.1} parent=1 // pred_check
      _
    $region3: #{tpu_custom_call.1} parent=1 // pred_check_branch
      %25 = sbr.rel (0) target = $region5
    $region4: #{tpu_custom_call.1} parent=1 // pred_region
      _
    $region5: #{tpu_custom_call.1} parent=1 // pred_fallthru
      _
    // Predicated region
    $region6: #{tpu_custom_call.1} parent=1 // pred_check
      _
    $region7: #{tpu_custom_call.1} parent=1 // pred_check_branch
      %27 = sbr.rel (0) target = $region9
    $region8: #{tpu_custom_call.1} parent=1 // pred_region
      _
    $region9: #{tpu_custom_call.1} parent=1 // pred_fallthru
      _
    // Predicated region
    $region10: #{tpu_custom_call.1} parent=1 // pred_check
      _
    $region11: #{tpu_custom_call.1} parent=1 // pred_check_branch
      %29 = sbr.rel (0) target = $region13
    $region12: #{tpu_custom_call.1} parent=1 // pred_region
      _
    $region13: #{tpu_custom_call.1} parent=1 // pred_fallthru
      _
    // Predicated region
    $region14: #{tpu_custom_call.1} parent=1 // pred_check
      _
    $region15: #{tpu_custom_call.1} parent=1 // pred_check_branch
      %31 = sbr.rel (0) target = $region17
    $region16: #{tpu_custom_call.1} parent=1 // pred_region
      _
    $region17: #{tpu_custom_call.1} parent=1 // pred_fallthru
      _
    // Predicated region
    $region18: #{tpu_custom_call.1} parent=1 // pred_check
      _
    $region19: #{tpu_custom_call.1} parent=1 // pred_check_branch
      %33 = sbr.rel (0) target = $region21
    $region20: #{tpu_custom_call.1} parent=1 // pred_region
      _
    $region21: #{tpu_custom_call.1} parent=1 // pred_fallthru
      _
    // Predicated region
    $region22: #{tpu_custom_call.1} parent=1 // pred_check
      _
    $region23: #{tpu_custom_call.1} parent=1 // pred_check_branch
      %35 = sbr.rel (0) target = $region25
    $region24: #{tpu_custom_call.1} parent=1 // pred_region
      _
    $region25: #{tpu_custom_call.1} parent=1 // pred_fallthru
      _
    // Predicated region
    $region26: #{tpu_custom_call.1} parent=1 // pred_check
      _
    $region27: #{tpu_custom_call.1} parent=1 // pred_check_branch
      %37 = sbr.rel (0) target = $region29
    $region28: #{tpu_custom_call.1} parent=1 // pred_region
      _
    $region29: #{tpu_custom_call.1} parent=1 // pred_fallthru
      _
    // Predicated region
    $region30: #{tpu_custom_call.1} parent=1 // pred_check
      _
    $region31: #{tpu_custom_call.1} parent=1 // pred_check_branch
      %39 = sbr.rel (0) target = $region33
    $region32: #{tpu_custom_call.1} parent=1 // pred_region
      _
    $region33: #{tpu_custom_call.1} parent=1 // pred_fallthru
      _
    // Predicated region
    $region34: #{tpu_custom_call.1} parent=1 // pred_check
      _
    $region35: #{tpu_custom_call.1} parent=1 // pred_check_branch
      %41 = sbr.rel (0) target = $region37
    $region36: #{tpu_custom_call.1} parent=1 // pred_region
      _
    $region37: #{tpu_custom_call.1} parent=1 // pred_fallthru
      _
    // Predicated region
    $region38: #{tpu_custom_call.1} parent=1 // pred_check
      _
    $region39: #{tpu_custom_call.1} parent=1 // pred_check_branch
      %43 = sbr.rel (0) target = $region41
    $region40: #{tpu_custom_call.1} parent=1 // pred_region
      _
    $region41: #{tpu_custom_call.1} parent=1 // pred_fallthru
      _
    // Predicated region
    $region42: #{tpu_custom_call.1} parent=1 // pred_check
      _
    $region43: #{tpu_custom_call.1} parent=1 // pred_check_branch
      %45 = sbr.rel (0) target = $region45
    $region44: #{tpu_custom_call.1} parent=1 // pred_region
      _
    $region45: #{tpu_custom_call.1} parent=1 // pred_fallthru
      _
    // Predicated region
    $region46: #{tpu_custom_call.1} parent=1 // pred_check
      _
    $region47: #{tpu_custom_call.1} parent=1 // pred_check_branch
      %47 = sbr.rel (0) target = $region49
    $region48: #{tpu_custom_call.1} parent=1 // pred_region
      _
    $region49: #{tpu_custom_call.1} parent=1 // pred_fallthru
      _
    // Predicated region
    $region50: #{tpu_custom_call.1} parent=1 // pred_check
      _
    $region51: #{tpu_custom_call.1} parent=1 // pred_check_branch
      %49 = sbr.rel (0) target = $region53
    $region52: #{tpu_custom_call.1} parent=1 // pred_region
      _
    $region53: #{tpu_custom_call.1} parent=1 // pred_fallthru
      _
    // Predicated region
    $region54: #{tpu_custom_call.1} parent=1 // pred_check
      _
    $region55: #{tpu_custom_call.1} parent=1 // pred_check_branch
      %51 = sbr.rel (0) target = $region57
    $region56: #{tpu_custom_call.1} parent=1 // pred_region
      _
    $region57: #{tpu_custom_call.1} parent=1 // pred_fallthru
      _
    // Predicated region
    $region58: #{tpu_custom_call.1} parent=1 // pred_check
      _
    $region59: #{tpu_custom_call.1} parent=1 // pred_check_branch
      %53 = sbr.rel (0) target = $region61
    $region60: #{tpu_custom_call.1} parent=1 // pred_region
      _
    $region61: #{tpu_custom_call.1} parent=1 // pred_fallthru
      _
    // Predicated region
    $region62: #{tpu_custom_call.1} parent=1 // pred_check
      _
    $region63: #{tpu_custom_call.1} parent=1 // pred_check_branch
      %55 = sbr.rel (0) target = $region65
    $region64: #{tpu_custom_call.1} parent=1 // pred_region
      _
    $region65: #{tpu_custom_call.1} parent=1 // pred_fallthru
      _
    // Predicated region
    $region66: #{tpu_custom_call.1} parent=1 // pred_check
      _
    $region67: #{tpu_custom_call.1} parent=1 // pred_check_branch
      %57 = sbr.rel (0) target = $region69
    $region68: #{tpu_custom_call.1} parent=1 // pred_region
      _
    $region69: #{tpu_custom_call.1} parent=1 // pred_fallthru
      _
    // Predicated region
    $region70: #{tpu_custom_call.1} parent=1 // pred_check
      _
    $region71: #{tpu_custom_call.1} parent=1 // pred_check_branch
      %59 = sbr.rel (0) target = $region73
    $region72: #{tpu_custom_call.1} parent=1 // pred_region
      _
    $region73: #{tpu_custom_call.1} parent=1 // pred_fallthru
      _
    %v61 = vld [vmem:[%s2] sm:$0xf]
    %v62 = vld [vmem:[%s2 + $0x4] sm:$0xf]
    %v63 = vld [vmem:[%s2 + $0x8] sm:$0xf]
    %v64 = vld [vmem:[%s2 + $0xc] sm:$0xf]
    %v65 = vld [vmem:[%s1] sm:$0xff]
    %v66 = vld [vmem:[%s3] sm:$0x3]
    %v67 = vld [vmem:[%s0] sm:$0xff]
    %v68 = vpack.c.bf16 %v67, %v67
    %vm69 = vcmask 31744
    %v71 = vsel %vm69, %v68, 0
    %vm73 = vcmask 1041408
    %v75 = vsel %vm73, %v66, 0
    %77 = vmatpush.bf16.msra.mxu0 0
    %78 = vmatpush.bf16.msra.mxu0 0
    %79 = vmatpush.bf16.msra.mxu0 0
    %80 = vmatpush.bf16.msra.mxu0 0
    %81 = vmatpush.bf16.msra.mxu0 0
    %82 = vmatpush.bf16.msra.mxu0 0
    %83 = vmatpush.bf16.msra.mxu0 0
    %84 = vmatpush.bf16.msra.mxu0 %v75
    %85 = vmatmul.bf16.gmra.mxu0 %v71
    %v86 = vpop.f32.mrf.mxu0
    %v87 = vadd.f32 %v65, %v86
    %v88 = vpop.f32.mrf.mxu0
    %89 = vdwg.mxu0
    %v90 = vld [vmem:[%s0 + $0x8] sm:$0xff]
    %v91 = vpack.c.bf16 %v90, %v90
    %v93 = vsel %vm69, %v91, 0
    %95 = vmatpush.bf16.msra.mxu0 0
    %96 = vmatpush.bf16.msra.mxu0 0
    %97 = vmatpush.bf16.msra.mxu0 0
    %98 = vmatpush.bf16.msra.mxu0 0
    %99 = vmatpush.bf16.msra.mxu0 0
    %100 = vmatpush.bf16.msra.mxu0 0
    %101 = vmatpush.bf16.msra.mxu0 0
    %102 = vmatpush.bf16.msra.mxu0 %v75
    %103 = vmatmul.bf16.gmra.mxu0 %v93
    %v104 = vpop.f32.mrf.mxu0
    %v105 = vadd.f32 %v65, %v104
    %v106 = vpop.f32.mrf.mxu0
    %107 = vdwg.mxu0
    %v108 = vld [vmem:[%s4] sm:$0xf]
    %v109 = vld [vmem:[%s4 + $0x4] sm:$0xf]
    %v110 = vld [vmem:[%s4 + $0x8] sm:$0xf]
    %v111 = vld [vmem:[%s4 + $0xc] sm:$0xf]
    %v112 = vld [vmem:[%s5] sm:$0x1]
    %v113 = vld [vmem:[%s6] sm:$0xf]
    %v114 = vld [vmem:[%s6 + $0x4] sm:$0xf]
    %v115 = vld [vmem:[%s6 + $0x8] sm:$0xf]
    %v116 = vld [vmem:[%s6 + $0xc] sm:$0xf]
    %v117 = vld [vmem:[%s7] sm:$0x1]
    %v118 = vld [vmem:[%s12] sm:$0xff]
    %v119 = vld [vmem:[%s12 + $0x8] sm:$0xff]
    %v120 = vld [vmem:[%s12 + $0x10] sm:$0xff]
    %v121 = vld [vmem:[%s12 + $0x18] sm:$0xff]
    %v122 = vld [vmem:[%s13] sm:$0x3]
    %v123 = vld [vmem:[%s14] sm:$0xf]
    %v124 = vld [vmem:[%s14 + $0x4] sm:$0xf]
    %v125 = vld [vmem:[%s14 + $0x8] sm:$0xf]
    %v126 = vld [vmem:[%s14 + $0xc] sm:$0xf]
    %v127 = vld [vmem:[%s14 + $0x10] sm:$0xf]
    %v128 = vld [vmem:[%s14 + $0x14] sm:$0xf]
    %v129 = vld [vmem:[%s14 + $0x18] sm:$0xf]
    %v130 = vld [vmem:[%s14 + $0x1c] sm:$0xf]
    %v131 = vld [vmem:[%s14 + $0x20] sm:$0xf]
    %v132 = vld [vmem:[%s14 + $0x24] sm:$0xf]
    %v133 = vld [vmem:[%s14 + $0x28] sm:$0xf]
    %v134 = vld [vmem:[%s14 + $0x2c] sm:$0xf]
    %v135 = vld [vmem:[%s14 + $0x30] sm:$0xf]
    %v136 = vld [vmem:[%s14 + $0x34] sm:$0xf]
    %v137 = vld [vmem:[%s14 + $0x38] sm:$0xf]
    %v138 = vld [vmem:[%s14 + $0x3c] sm:$0xf]
    %v139 = vld [vmem:[%s14 + $0x40] sm:$0xf]
    %v140 = vld [vmem:[%s14 + $0x44] sm:$0xf]
    %v141 = vld [vmem:[%s14 + $0x48] sm:$0xf]
    %v142 = vld [vmem:[%s14 + $0x4c] sm:$0xf]
    %v143 = vld [vmem:[%s14 + $0x50] sm:$0xf]
    %v144 = vld [vmem:[%s14 + $0x54] sm:$0xf]
    %v145 = vld [vmem:[%s14 + $0x58] sm:$0xf]
    %v146 = vld [vmem:[%s14 + $0x5c] sm:$0xf]
    %v147 = vld [vmem:[%s14 + $0x60] sm:$0xf]
    %v148 = vld [vmem:[%s14 + $0x64] sm:$0xf]
    %v149 = vld [vmem:[%s14 + $0x68] sm:$0xf]
    %v150 = vld [vmem:[%s14 + $0x6c] sm:$0xf]
    %v151 = vld [vmem:[%s14 + $0x70] sm:$0xf]
    %v152 = vld [vmem:[%s14 + $0x74] sm:$0xf]
    %v153 = vld [vmem:[%s14 + $0x78] sm:$0xf]
    %v154 = vld [vmem:[%s14 + $0x7c] sm:$0xf]
    %v155 = vld [vmem:[%s15] sm:$0x1]
    %v156 = vld [vmem:[%s8] sm:$0x1]
    %v157 = vld [vmem:[%s9] sm:$0x1]
    %v158 = vld [vmem:[%s10] sm:$0x1]
    %v159 = vld [vmem:[%s11] sm:$0x1]
    %v160 = vpack.c.bf16 %v87, %v87
    %v162 = vperm.slane %v112, 0
    %v168 = vunpack.c.l.b16 %v108
    %v169 = vunpack.c.l.b16 %v109
    %v170 = vunpack.c.l.b16 %v110
    %v171 = vunpack.c.l.b16 %v111
    %v172 = vpack.c.b16 %v169, %v168
    %v173 = vpack.c.b16 %v171, %v170
    %vm176 = vcmask 261120
    %v178 = vsel %vm176, %v160, 0
    %180 = vmatpush.bf16.msra.mxu0 0
    %181 = vmatpush.bf16.msra.mxu0 0
    %182 = vmatpush.bf16.msra.mxu0 0
    %183 = vmatpush.bf16.msra.mxu0 0
    %184 = vmatpush.bf16.msra.mxu0 0
    %185 = vmatpush.bf16.msra.mxu0 0
    %186 = vmatpush.bf16.msra.mxu0 %v173
    %187 = vmatpush.bf16.msra.mxu0 %v172
    %188 = vmatmul.bf16.gmra.mxu0 %v178
    %v189 = vpop.f32.mrf.mxu0
    %v190 = vadd.f32 %v162, %v189
    %v191 = vpop.f32.mrf.mxu0
    %192 = vdwg.mxu0
    %v193 = vpack.c.bf16 %v105, %v105
    %v195 = vsel %vm176, %v193, 0
    %197 = vmatpush.bf16.msra.mxu0 0
    %198 = vmatpush.bf16.msra.mxu0 0
    %199 = vmatpush.bf16.msra.mxu0 0
    %200 = vmatpush.bf16.msra.mxu0 0
    %201 = vmatpush.bf16.msra.mxu0 0
    %202 = vmatpush.bf16.msra.mxu0 0
    %203 = vmatpush.bf16.msra.mxu0 %v173
    %204 = vmatpush.bf16.msra.mxu0 %v172
    %205 = vmatmul.bf16.gmra.mxu0 %v195
    %v206 = vpop.f32.mrf.mxu0
    %v207 = vadd.f32 %v162, %v206
    %v208 = vpop.f32.mrf.mxu0
    %209 = vdwg.mxu0
    %211 = vrot.lane.b32.xlu0 %v190, 96
    %v212 = vpop.permute.xlu0 %211
    %v214 = vmul.f32 %v190, %v212
    %v215 = vpack.c.bf16 %v214, %v214
    %v220 = vunpack.c.l.b16 %v61
    %v221 = vunpack.c.l.b16 %v62
    %v222 = vunpack.c.l.b16 %v63
    %v223 = vunpack.c.l.b16 %v64
    %v224 = vpack.c.b16 %v221, %v220
    %v225 = vpack.c.b16 %v223, %v222
    %v229 = vsel %vm176, %v215, 0
    %231 = vmatpush.bf16.msra.mxu0 0
    %232 = vmatpush.bf16.msra.mxu0 0
    %233 = vmatpush.bf16.msra.mxu0 0
    %234 = vmatpush.bf16.msra.mxu0 0
    %235 = vmatpush.bf16.msra.mxu0 0
    %236 = vmatpush.bf16.msra.mxu0 0
    %237 = vmatpush.bf16.msra.mxu0 %v225
    %238 = vmatpush.bf16.msra.mxu0 %v224
    %239 = vmatmul.bf16.gmra.mxu0 %v229
    %v240 = vpop.f32.mrf.mxu0
    %v241 = vadd.f32 0.0, %v240
    %v242 = vpop.f32.mrf.mxu0
    %243 = vdwg.mxu0
    %245 = vrot.lane.b32.xlu0 %v207, 96
    %v246 = vpop.permute.xlu0 %245
    %v248 = vmul.f32 %v190, %v246
    %v249 = vpack.c.bf16 %v248, %v248
    %v251 = vsel %vm176, %v249, 0
    %253 = vmatpush.bf16.msra.mxu0 0
    %254 = vmatpush.bf16.msra.mxu0 0
    %255 = vmatpush.bf16.msra.mxu0 0
    %256 = vmatpush.bf16.msra.mxu0 0
    %257 = vmatpush.bf16.msra.mxu0 0
    %258 = vmatpush.bf16.msra.mxu0 0
    %259 = vmatpush.bf16.msra.mxu0 %v225
    %260 = vmatpush.bf16.msra.mxu0 %v224
    %261 = vmatmul.bf16.gmra.mxu0 %v251
    %v262 = vpop.f32.mrf.mxu0
    %v263 = vadd.f32 0.0, %v262
    %v264 = vpop.f32.mrf.mxu0
    %265 = vdwg.mxu0
    %v266 = vmax.f32 %v241, %v263
    %v267 = vsub.f32 %v241, %v266
    %v268 = vmul.f32 %v267, 1.442695
    %v269 = vpow.pop %v268
    %v270 = vsub.f32 %v263, %v266
    %v271 = vmul.f32 %v270, 1.442695
    %v272 = vpow.pop %v271
    %v273 = vadd.f32 %v269, %v272
    %274 = vrot.lane.b32.xlu0 %v190, 64
    %v275 = vpop.permute.xlu0 %274
    %v277 = vmul.f32 %v269, %v275
    %278 = vrot.lane.b32.xlu0 %v207, 64
    %v279 = vpop.permute.xlu0 %278
    %v281 = vmul.f32 %v272, %v279
    %v282 = vadd.f32 %v277, %v281
    %v283 = vrcp.pop %v273
    %v284 = vmul.f32 %v273, %v283
    %v285 = vsub.f32 1.0, %v284
    %v286 = vmul.f32 %v283, %v285
    %v287 = vadd.f32 %v283, %v286
    %vm288 = vweird.f32 %v273
    %vm289 = vweird.f32 %v283
    %vm290 = vmor %vm288, %vm289
    %v291 = vsel %vm290, %v283, %v287
    %v292 = vand.u32 2147483647, %v273
    %vm293 = vcmp.eq.f32.partialorder %v292, 8.507059e+37
    %v294 = vand.u32 %v273, 2147483648
    %v295 = vor.u32 1.1754944e-38, %v294
    %v296 = vsel %vm293, %v295, %v291
    %v297 = vmul.f32 %v282, %v296
    %v298 = vpack.c.bf16 %v297, %v297
    %v300 = vperm.slane %v117, 0
    %v306 = vunpack.c.l.b16 %v113
    %v307 = vunpack.c.l.b16 %v114
    %v308 = vunpack.c.l.b16 %v115
    %v309 = vunpack.c.l.b16 %v116
    %v310 = vpack.c.b16 %v307, %v306
    %v311 = vpack.c.b16 %v309, %v308
    %v315 = vsel %vm176, %v298, 0
    %317 = vmatpush.bf16.msra.mxu0 0
    %318 = vmatpush.bf16.msra.mxu0 0
    %319 = vmatpush.bf16.msra.mxu0 0
    %320 = vmatpush.bf16.msra.mxu0 0
    %321 = vmatpush.bf16.msra.mxu0 0
    %322 = vmatpush.bf16.msra.mxu0 0
    %323 = vmatpush.bf16.msra.mxu0 %v311
    %324 = vmatpush.bf16.msra.mxu0 %v310
    %325 = vmatmul.bf16.gmra.mxu0 %v315
    %v326 = vpop.f32.mrf.mxu0
    %v327 = vadd.f32 %v300, %v326
    %v328 = vpop.f32.mrf.mxu0
    %329 = vdwg.mxu0
    %v330 = vadd.f32 %v87, %v327
    %v331 = vsel %vm176, %v330, 0.0
    %332 = vadd.xlane.f32.xlu0 %v331
    %v333 = vpop.xlane.xlu0 %332
    %v334 = vrcp.pop 32.0
    %v335 = vmul.f32 32.0, %v334
    %v336 = vsub.f32 1.0, %v335
    %v337 = vmul.f32 %v334, %v336
    %v338 = vadd.f32 %v334, %v337
    %vm339 = vweird.f32 %v334
    %v340 = vsel %vm339, %v334, %v338
    %v341 = vmul.f32 %v333, %v340
    %v342 = vmul.f32 %v330, %v330
    %v343 = vsel %vm176, %v342, 0.0
    %344 = vadd.xlane.f32.xlu0 %v343
    %v345 = vpop.xlane.xlu0 %344
    %v346 = vmul.f32 %v345, %v340
    %v347 = vmul.f32 %v341, %v341
    %v348 = vsub.f32 %v346, %v347
    %v349 = vsub.f32 %v330, %v341
    %v350 = vadd.f32 %v348, 1e-05
    %v351 = vrsqrt.pop %v350
    %v352 = vmul.f32 %v351, %v350
    %v353 = vmul.f32 %v352, %v351
    %v354 = vmul.f32 0.5, %v353
    %v355 = vsub.f32 1.5, %v354
    %v356 = vmul.f32 %v351, %v355
    %vm357 = vweird.f32 %v350
    %vm358 = vweird.f32 %v351
    %vm359 = vmor %vm357, %vm358
    %v360 = vsel %vm359, %v351, %v356
    %v361 = vmul.f32 %v349, %v360
    %v363 = vperm.slane %v156, 0
    %v365 = vmul.f32 %v361, %v363
    %v367 = vperm.slane %v157, 0
    %v369 = vadd.f32 %v365, %v367
    %v370 = vpack.c.bf16 %v369, %v369
    %v372 = vperm.slane %v122, 0
    %v373 = vperm.slane %v122, 1
    %v380 = vunpack.c.l.b16 %v118
    %v381 = vunpack.c.h.b16 %v118
    %v382 = vunpack.c.l.b16 %v119
    %v383 = vunpack.c.h.b16 %v119
    %v384 = vunpack.c.l.b16 %v120
    %v385 = vunpack.c.h.b16 %v120
    %v386 = vunpack.c.l.b16 %v121
    %v387 = vunpack.c.h.b16 %v121
    %v388 = vpack.c.b16 %v382, %v380
    %v389 = vpack.c.b16 %v383, %v381
    %v390 = vpack.c.b16 %v386, %v384
    %v391 = vpack.c.b16 %v387, %v385
    %v397 = vsel %vm176, %v370, 0
    %399 = vmatpush.bf16.msra.mxu0 0
    %400 = vmatpush.bf16.msra.mxu0 0
    %401 = vmatpush.bf16.msra.mxu0 0
    %402 = vmatpush.bf16.msra.mxu0 0
    %403 = vmatpush.bf16.msra.mxu0 0
    %404 = vmatpush.bf16.msra.mxu0 0
    %405 = vmatpush.bf16.msra.mxu0 %v390
    %406 = vmatpush.bf16.msra.mxu0 %v388
    %407 = vmatmul.bf16.gmra.mxu0 %v397
    %v408 = vpop.f32.mrf.mxu0
    %v409 = vadd.f32 %v372, %v408
    %v410 = vpop.f32.mrf.mxu0
    %411 = vdwg.mxu0
    %412 = vmatpush.bf16.msra.mxu0 0
    %413 = vmatpush.bf16.msra.mxu0 0
    %414 = vmatpush.bf16.msra.mxu0 0
    %415 = vmatpush.bf16.msra.mxu0 0
    %416 = vmatpush.bf16.msra.mxu0 0
    %417 = vmatpush.bf16.msra.mxu0 0
    %418 = vmatpush.bf16.msra.mxu0 %v391
    %419 = vmatpush.bf16.msra.mxu0 %v389
    %420 = vmatmul.bf16.gmra.mxu0 %v397
    %v421 = vpop.f32.mrf.mxu0
    %v422 = vadd.f32 %v373, %v421
    %v423 = vpop.f32.mrf.mxu0
    %424 = vdwg.mxu0
    %v425 = vmax.f32 %v409, 0.0
    %v426 = vmax.f32 %v422, 0.0
    %v427 = vpack.c.bf16 %v425, %v425
    %v428 = vpack.c.bf16 %v426, %v426
    %v430 = vperm.slane %v155, 0
    %v464 = vunpack.c.l.b16 %v123
    %v465 = vunpack.c.l.b16 %v124
    %v466 = vunpack.c.l.b16 %v125
    %v467 = vunpack.c.l.b16 %v126
    %v468 = vunpack.c.l.b16 %v127
    %v469 = vunpack.c.l.b16 %v128
    %v470 = vunpack.c.l.b16 %v129
    %v471 = vunpack.c.l.b16 %v130
    %v472 = vunpack.c.l.b16 %v131
    %v473 = vunpack.c.l.b16 %v132
    %v474 = vunpack.c.l.b16 %v133
    %v475 = vunpack.c.l.b16 %v134
    %v476 = vunpack.c.l.b16 %v135
    %v477 = vunpack.c.l.b16 %v136
    %v478 = vunpack.c.l.b16 %v137
    %v479 = vunpack.c.l.b16 %v138
    %v480 = vunpack.c.l.b16 %v139
    %v481 = vunpack.c.l.b16 %v140
    %v482 = vunpack.c.l.b16 %v141
    %v483 = vunpack.c.l.b16 %v142
    %v484 = vunpack.c.l.b16 %v143
    %v485 = vunpack.c.l.b16 %v144
    %v486 = vunpack.c.l.b16 %v145
    %v487 = vunpack.c.l.b16 %v146
    %v488 = vunpack.c.l.b16 %v147
    %v489 = vunpack.c.l.b16 %v148
    %v490 = vunpack.c.l.b16 %v149
    %v491 = vunpack.c.l.b16 %v150
    %v492 = vunpack.c.l.b16 %v151
    %v493 = vunpack.c.l.b16 %v152
    %v494 = vunpack.c.l.b16 %v153
    %v495 = vunpack.c.l.b16 %v154
    %v496 = vpack.c.b16 %v465, %v464
    %v497 = vpack.c.b16 %v467, %v466
    %v498 = vpack.c.b16 %v469, %v468
    %v499 = vpack.c.b16 %v471, %v470
    %v500 = vpack.c.b16 %v473, %v472
    %v501 = vpack.c.b16 %v475, %v474
    %v502 = vpack.c.b16 %v477, %v476
    %v503 = vpack.c.b16 %v479, %v478
    %v504 = vpack.c.b16 %v481, %v480
    %v505 = vpack.c.b16 %v483, %v482
    %v506 = vpack.c.b16 %v485, %v484
    %v507 = vpack.c.b16 %v487, %v486
    %v508 = vpack.c.b16 %v489, %v488
    %v509 = vpack.c.b16 %v491, %v490
    %v510 = vpack.c.b16 %v493, %v492
    %v511 = vpack.c.b16 %v495, %v494
    %528 = vmatpush.bf16.msra.mxu0 %v503
    %529 = vmatpush.bf16.msra.mxu0 %v502
    %530 = vmatpush.bf16.msra.mxu0 %v501
    %531 = vmatpush.bf16.msra.mxu0 %v500
    %532 = vmatpush.bf16.msra.mxu0 %v499
    %533 = vmatpush.bf16.msra.mxu0 %v498
    %534 = vmatpush.bf16.msra.mxu0 %v497
    %535 = vmatpush.bf16.msra.mxu0 %v496
    %536 = vmatmul.bf16.gmra.mxu0 %v427
    %v537 = vpop.f32.mrf.mxu0
    %v538 = vadd.f32 %v430, %v537
    %v539 = vpop.f32.mrf.mxu0
    %540 = vdwg.mxu0
    %541 = vmatpush.bf16.msra.mxu0 %v511
    %542 = vmatpush.bf16.msra.mxu0 %v510
    %543 = vmatpush.bf16.msra.mxu0 %v509
    %544 = vmatpush.bf16.msra.mxu0 %v508
    %545 = vmatpush.bf16.msra.mxu0 %v507
    %546 = vmatpush.bf16.msra.mxu0 %v506
    %547 = vmatpush.bf16.msra.mxu0 %v505
    %548 = vmatpush.bf16.msra.mxu0 %v504
    %549 = vmatmul.bf16.gmra.mxu0 %v428
    %v550 = vpop.f32.mrf.mxu0
    %v551 = vadd.f32 %v538, %v550
    %v552 = vpop.f32.mrf.mxu0
    %553 = vdwg.mxu0
    %v554 = vadd.f32 %v369, %v551
    %v555 = vsel %vm176, %v554, 0.0
    %556 = vadd.xlane.f32.xlu0 %v555
    %v557 = vpop.xlane.xlu0 %556
    %v558 = vmul.f32 %v557, %v340
    %v559 = vmul.f32 %v554, %v554
    %v560 = vsel %vm176, %v559, 0.0
    %561 = vadd.xlane.f32.xlu0 %v560
    %v562 = vpop.xlane.xlu0 %561
    %v563 = vmul.f32 %v562, %v340
    %v564 = vmul.f32 %v558, %v558
    %v565 = vsub.f32 %v563, %v564
    %v566 = vsub.f32 %v554, %v558
    %v567 = vadd.f32 %v565, 1e-05
    %v568 = vrsqrt.pop %v567
    %v569 = vmul.f32 %v568, %v567
    %v570 = vmul.f32 %v569, %v568
    %v571 = vmul.f32 0.5, %v570
    %v572 = vsub.f32 1.5, %v571
    %v573 = vmul.f32 %v568, %v572
    %vm574 = vweird.f32 %v567
    %vm575 = vweird.f32 %v568
    %vm576 = vmor %vm574, %vm575
    %v577 = vsel %vm576, %v568, %v573
    %v578 = vmul.f32 %v566, %v577
    %v580 = vperm.slane %v158, 0
    %v582 = vmul.f32 %v578, %v580
    %v584 = vperm.slane %v159, 0
    %v586 = vadd.f32 %v582, %v584
    %v587 = vmul.f32 %v207, %v212
    %v588 = vpack.c.bf16 %v587, %v587
    %v590 = vsel %vm176, %v588, 0
    %592 = vmatpush.bf16.msra.mxu0 0
    %593 = vmatpush.bf16.msra.mxu0 0
    %594 = vmatpush.bf16.msra.mxu0 0
    %595 = vmatpush.bf16.msra.mxu0 0
    %596 = vmatpush.bf16.msra.mxu0 0
    %597 = vmatpush.bf16.msra.mxu0 0
    %598 = vmatpush.bf16.msra.mxu0 %v225
    %599 = vmatpush.bf16.msra.mxu0 %v224
    %600 = vmatmul.bf16.gmra.mxu0 %v590
    %v601 = vpop.f32.mrf.mxu0
    %v602 = vadd.f32 0.0, %v601
    %v603 = vpop.f32.mrf.mxu0
    %604 = vdwg.mxu0
    %v605 = vmul.f32 %v207, %v246
    %v606 = vpack.c.bf16 %v605, %v605
    %v608 = vsel %vm176, %v606, 0
    %610 = vmatpush.bf16.msra.mxu0 0
    %611 = vmatpush.bf16.msra.mxu0 0
    %612 = vmatpush.bf16.msra.mxu0 0
    %613 = vmatpush.bf16.msra.mxu0 0
    %614 = vmatpush.bf16.msra.mxu0 0
    %615 = vmatpush.bf16.msra.mxu0 0
    %616 = vmatpush.bf16.msra.mxu0 %v225
    %617 = vmatpush.bf16.msra.mxu0 %v224
    %618 = vmatmul.bf16.gmra.mxu0 %v608
    %v619 = vpop.f32.mrf.mxu0
    %v620 = vadd.f32 0.0, %v619
    %v621 = vpop.f32.mrf.mxu0
    %622 = vdwg.mxu0
    %v623 = vmax.f32 %v602, %v620
    %v624 = vsub.f32 %v602, %v623
    %v625 = vmul.f32 %v624, 1.442695
    %v626 = vpow.pop %v625
    %v627 = vsub.f32 %v620, %v623
    %v628 = vmul.f32 %v627, 1.442695
    %v629 = vpow.pop %v628
    %v630 = vadd.f32 %v626, %v629
    %v631 = vmul.f32 %v626, %v275
    %v632 = vmul.f32 %v629, %v279
    %v633 = vadd.f32 %v631, %v632
    %v634 = vrcp.pop %v630
    %v635 = vmul.f32 %v630, %v634
    %v636 = vsub.f32 1.0, %v635
    %v637 = vmul.f32 %v634, %v636
    %v638 = vadd.f32 %v634, %v637
    %vm639 = vweird.f32 %v630
    %vm640 = vweird.f32 %v634
    %vm641 = vmor %vm639, %vm640
    %v642 = vsel %vm641, %v634, %v638
    %v643 = vand.u32 2147483647, %v630
    %vm644 = vcmp.eq.f32.partialorder %v643, 8.507059e+37
    %v645 = vand.u32 %v630, 2147483648
    %v646 = vor.u32 1.1754944e-38, %v645
    %v647 = vsel %vm644, %v646, %v642
    %v648 = vmul.f32 %v633, %v647
    %v649 = vpack.c.bf16 %v648, %v648
    %v651 = vsel %vm176, %v649, 0
    %653 = vmatpush.bf16.msra.mxu0 0
    %654 = vmatpush.bf16.msra.mxu0 0
    %655 = vmatpush.bf16.msra.mxu0 0
    %656 = vmatpush.bf16.msra.mxu0 0
    %657 = vmatpush.bf16.msra.mxu0 0
    %658 = vmatpush.bf16.msra.mxu0 0
    %659 = vmatpush.bf16.msra.mxu0 %v311
    %660 = vmatpush.bf16.msra.mxu0 %v310
    %661 = vmatmul.bf16.gmra.mxu0 %v651
    %v662 = vpop.f32.mrf.mxu0
    %v663 = vadd.f32 %v300, %v662
    %v664 = vpop.f32.mrf.mxu0
    %665 = vdwg.mxu0
    %v666 = vadd.f32 %v105, %v663
    %v667 = vsel %vm176, %v666, 0.0
    %668 = vadd.xlane.f32.xlu0 %v667
    %v669 = vpop.xlane.xlu0 %668
    %v670 = vmul.f32 %v669, %v340
    %v671 = vmul.f32 %v666, %v666
    %v672 = vsel %vm176, %v671, 0.0
    %673 = vadd.xlane.f32.xlu0 %v672
    %v674 = vpop.xlane.xlu0 %673
    %v675 = vmul.f32 %v674, %v340
    %v676 = vmul.f32 %v670, %v670
    %v677 = vsub.f32 %v675, %v676
    %v678 = vsub.f32 %v666, %v670
    %v679 = vadd.f32 %v677, 1e-05
    %v680 = vrsqrt.pop %v679
    %v681 = vmul.f32 %v680, %v679
    %v682 = vmul.f32 %v681, %v680
    %v683 = vmul.f32 0.5, %v682
    %v684 = vsub.f32 1.5, %v683
    %v685 = vmul.f32 %v680, %v684
    %vm686 = vweird.f32 %v679
    %vm687 = vweird.f32 %v680
    %vm688 = vmor %vm686, %vm687
    %v689 = vsel %vm688, %v680, %v685
    %v690 = vmul.f32 %v678, %v689
    %v691 = vmul.f32 %v690, %v363
    %v692 = vadd.f32 %v691, %v367
    %v693 = vpack.c.bf16 %v692, %v692
    %v695 = vsel %vm176, %v693, 0
    %697 = vmatpush.bf16.msra.mxu0 0
    %698 = vmatpush.bf16.msra.mxu0 0
    %699 = vmatpush.bf16.msra.mxu0 0
    %700 = vmatpush.bf16.msra.mxu0 0
    %701 = vmatpush.bf16.msra.mxu0 0
    %702 = vmatpush.bf16.msra.mxu0 0
    %703 = vmatpush.bf16.msra.mxu0 %v390
    %704 = vmatpush.bf16.msra.mxu0 %v388
    %705 = vmatmul.bf16.gmra.mxu0 %v695
    %v706 = vpop.f32.mrf.mxu0
    %v707 = vadd.f32 %v372, %v706
    %v708 = vpop.f32.mrf.mxu0
    %709 = vdwg.mxu0
    %710 = vmatpush.bf16.msra.mxu0 0
    %711 = vmatpush.bf16.msra.mxu0 0
    %712 = vmatpush.bf16.msra.mxu0 0
    %713 = vmatpush.bf16.msra.mxu0 0
    %714 = vmatpush.bf16.msra.mxu0 0
    %715 = vmatpush.bf16.msra.mxu0 0
    %716 = vmatpush.bf16.msra.mxu0 %v391
    %717 = vmatpush.bf16.msra.mxu0 %v389
    %718 = vmatmul.bf16.gmra.mxu0 %v695
    %v719 = vpop.f32.mrf.mxu0
    %v720 = vadd.f32 %v373, %v719
    %v721 = vpop.f32.mrf.mxu0
    %722 = vdwg.mxu0
    %v723 = vmax.f32 %v707, 0.0
    %v724 = vmax.f32 %v720, 0.0
    %v725 = vpack.c.bf16 %v723, %v723
    %v726 = vpack.c.bf16 %v724, %v724
    %727 = vmatpush.bf16.msra.mxu0 %v503
    %728 = vmatpush.bf16.msra.mxu0 %v502
    %729 = vmatpush.bf16.msra.mxu0 %v501
    %730 = vmatpush.bf16.msra.mxu0 %v500
    %731 = vmatpush.bf16.msra.mxu0 %v499
    %732 = vmatpush.bf16.msra.mxu0 %v498
    %733 = vmatpush.bf16.msra.mxu0 %v497
    %734 = vmatpush.bf16.msra.mxu0 %v496
    %735 = vmatmul.bf16.gmra.mxu0 %v725
    %v736 = vpop.f32.mrf.mxu0
    %v737 = vadd.f32 %v430, %v736
    %v738 = vpop.f32.mrf.mxu0
    %739 = vdwg.mxu0
    %740 = vmatpush.bf16.msra.mxu0 %v511
    %741 = vmatpush.bf16.msra.mxu0 %v510
    %742 = vmatpush.bf16.msra.mxu0 %v509
    %743 = vmatpush.bf16.msra.mxu0 %v508
    %744 = vmatpush.bf16.msra.mxu0 %v507
    %745 = vmatpush.bf16.msra.mxu0 %v506
    %746 = vmatpush.bf16.msra.mxu0 %v505
    %747 = vmatpush.bf16.msra.mxu0 %v504
    %748 = vmatmul.bf16.gmra.mxu0 %v726
    %v749 = vpop.f32.mrf.mxu0
    %v750 = vadd.f32 %v737, %v749
    %v751 = vpop.f32.mrf.mxu0
    %752 = vdwg.mxu0
    %v753 = vadd.f32 %v692, %v750
    %v754 = vsel %vm176, %v753, 0.0
    %755 = vadd.xlane.f32.xlu0 %v754
    %v756 = vpop.xlane.xlu0 %755
    %v757 = vmul.f32 %v756, %v340
    %v758 = vmul.f32 %v753, %v753
    %v759 = vsel %vm176, %v758, 0.0
    %760 = vadd.xlane.f32.xlu0 %v759
    %v761 = vpop.xlane.xlu0 %760
    %v762 = vmul.f32 %v761, %v340
    %v763 = vmul.f32 %v757, %v757
    %v764 = vsub.f32 %v762, %v763
    %v765 = vsub.f32 %v753, %v757
    %v766 = vadd.f32 %v764, 1e-05
    %v767 = vrsqrt.pop %v766
    %v768 = vmul.f32 %v767, %v766
    %v769 = vmul.f32 %v768, %v767
    %v770 = vmul.f32 0.5, %v769
    %v771 = vsub.f32 1.5, %v770
    %v772 = vmul.f32 %v767, %v771
    %vm773 = vweird.f32 %v766
    %vm774 = vweird.f32 %v767
    %vm775 = vmor %vm773, %vm774
    %v776 = vsel %vm775, %v767, %v772
    %v777 = vmul.f32 %v765, %v776
    %v778 = vmul.f32 %v777, %v580
    %v779 = vadd.f32 %v778, %v584
    %s780 = scalar_lea.vmem %s4, 16
    %v781 = vld [vmem:[%s780] sm:$0xf]
    %v782 = vld [vmem:[%s780 + $0x4] sm:$0xf]
    %v783 = vld [vmem:[%s780 + $0x8] sm:$0xf]
    %v784 = vld [vmem:[%s780 + $0xc] sm:$0xf]
    %s785 = scalar_lea.vmem %s5, 1
    %v786 = vld [vmem:[%s785] sm:$0x1]
    %s787 = scalar_lea.vmem %s6, 16
    %v788 = vld [vmem:[%s787] sm:$0xf]
    %v789 = vld [vmem:[%s787 + $0x4] sm:$0xf]
    %v790 = vld [vmem:[%s787 + $0x8] sm:$0xf]
    %v791 = vld [vmem:[%s787 + $0xc] sm:$0xf]
    %s792 = scalar_lea.vmem %s7, 1
    %v793 = vld [vmem:[%s792] sm:$0x1]
    %s794 = scalar_lea.vmem %s12, 32
    %v795 = vld [vmem:[%s794] sm:$0xff]
    %v796 = vld [vmem:[%s794 + $0x8] sm:$0xff]
    %v797 = vld [vmem:[%s794 + $0x10] sm:$0xff]
    %v798 = vld [vmem:[%s794 + $0x18] sm:$0xff]
    %s799 = scalar_lea.vmem %s13, 2
    %v800 = vld [vmem:[%s799] sm:$0x3]
    %s801 = scalar_lea.vmem %s14, 128
    %v802 = vld [vmem:[%s801] sm:$0xf]
    %v803 = vld [vmem:[%s801 + $0x4] sm:$0xf]
    %v804 = vld [vmem:[%s801 + $0x8] sm:$0xf]
    %v805 = vld [vmem:[%s801 + $0xc] sm:$0xf]
    %v806 = vld [vmem:[%s801 + $0x10] sm:$0xf]
    %v807 = vld [vmem:[%s801 + $0x14] sm:$0xf]
    %v808 = vld [vmem:[%s801 + $0x18] sm:$0xf]
    %v809 = vld [vmem:[%s801 + $0x1c] sm:$0xf]
    %v810 = vld [vmem:[%s801 + $0x20] sm:$0xf]
    %v811 = vld [vmem:[%s801 + $0x24] sm:$0xf]
    %v812 = vld [vmem:[%s801 + $0x28] sm:$0xf]
    %v813 = vld [vmem:[%s801 + $0x2c] sm:$0xf]
    %v814 = vld [vmem:[%s801 + $0x30] sm:$0xf]
    %v815 = vld [vmem:[%s801 + $0x34] sm:$0xf]
    %v816 = vld [vmem:[%s801 + $0x38] sm:$0xf]
    %v817 = vld [vmem:[%s801 + $0x3c] sm:$0xf]
    %v818 = vld [vmem:[%s801 + $0x40] sm:$0xf]
    %v819 = vld [vmem:[%s801 + $0x44] sm:$0xf]
    %v820 = vld [vmem:[%s801 + $0x48] sm:$0xf]
    %v821 = vld [vmem:[%s801 + $0x4c] sm:$0xf]
    %v822 = vld [vmem:[%s801 + $0x50] sm:$0xf]
    %v823 = vld [vmem:[%s801 + $0x54] sm:$0xf]
    %v824 = vld [vmem:[%s801 + $0x58] sm:$0xf]
    %v825 = vld [vmem:[%s801 + $0x5c] sm:$0xf]
    %v826 = vld [vmem:[%s801 + $0x60] sm:$0xf]
    %v827 = vld [vmem:[%s801 + $0x64] sm:$0xf]
    %v828 = vld [vmem:[%s801 + $0x68] sm:$0xf]
    %v829 = vld [vmem:[%s801 + $0x6c] sm:$0xf]
    %v830 = vld [vmem:[%s801 + $0x70] sm:$0xf]
    %v831 = vld [vmem:[%s801 + $0x74] sm:$0xf]
    %v832 = vld [vmem:[%s801 + $0x78] sm:$0xf]
    %v833 = vld [vmem:[%s801 + $0x7c] sm:$0xf]
    %s834 = scalar_lea.vmem %s15, 1
    %v835 = vld [vmem:[%s834] sm:$0x1]
    %s836 = scalar_lea.vmem %s8, 1
    %v837 = vld [vmem:[%s836] sm:$0x1]
    %s838 = scalar_lea.vmem %s9, 1
    %v839 = vld [vmem:[%s838] sm:$0x1]
    %s840 = scalar_lea.vmem %s10, 1
    %v841 = vld [vmem:[%s840] sm:$0x1]
    %s842 = scalar_lea.vmem %s11, 1
    %v843 = vld [vmem:[%s842] sm:$0x1]
    %v844 = vpack.c.bf16 %v586, %v586
    %v846 = vperm.slane %v786, 0
    %v852 = vunpack.c.l.b16 %v781
    %v853 = vunpack.c.l.b16 %v782
    %v854 = vunpack.c.l.b16 %v783
    %v855 = vunpack.c.l.b16 %v784
    %v856 = vpack.c.b16 %v853, %v852
    %v857 = vpack.c.b16 %v855, %v854
    %v861 = vsel %vm176, %v844, 0
    %863 = vmatpush.bf16.msra.mxu0 0
    %864 = vmatpush.bf16.msra.mxu0 0
    %865 = vmatpush.bf16.msra.mxu0 0
    %866 = vmatpush.bf16.msra.mxu0 0
    %867 = vmatpush.bf16.msra.mxu0 0
    %868 = vmatpush.bf16.msra.mxu0 0
    %869 = vmatpush.bf16.msra.mxu0 %v857
    %870 = vmatpush.bf16.msra.mxu0 %v856
    %871 = vmatmul.bf16.gmra.mxu0 %v861
    %v872 = vpop.f32.mrf.mxu0
    %v873 = vadd.f32 %v846, %v872
    %v874 = vpop.f32.mrf.mxu0
    %875 = vdwg.mxu0
    %v876 = vpack.c.bf16 %v779, %v779
    %v878 = vsel %vm176, %v876, 0
    %880 = vmatpush.bf16.msra.mxu0 0
    %881 = vmatpush.bf16.msra.mxu0 0
    %882 = vmatpush.bf16.msra.mxu0 0
    %883 = vmatpush.bf16.msra.mxu0 0
    %884 = vmatpush.bf16.msra.mxu0 0
    %885 = vmatpush.bf16.msra.mxu0 0
    %886 = vmatpush.bf16.msra.mxu0 %v857
    %887 = vmatpush.bf16.msra.mxu0 %v856
    %888 = vmatmul.bf16.gmra.mxu0 %v878
    %v889 = vpop.f32.mrf.mxu0
    %v890 = vadd.f32 %v846, %v889
    %v891 = vpop.f32.mrf.mxu0
    %892 = vdwg.mxu0
    %894 = vrot.lane.b32.xlu0 %v873, 96
    %v895 = vpop.permute.xlu0 %894
    %v897 = vmul.f32 %v873, %v895
    %v898 = vpack.c.bf16 %v897, %v897
    %v900 = vsel %vm176, %v898, 0
    %902 = vmatpush.bf16.msra.mxu0 0
    %903 = vmatpush.bf16.msra.mxu0 0
    %904 = vmatpush.bf16.msra.mxu0 0
    %905 = vmatpush.bf16.msra.mxu0 0
    %906 = vmatpush.bf16.msra.mxu0 0
    %907 = vmatpush.bf16.msra.mxu0 0
    %908 = vmatpush.bf16.msra.mxu0 %v225
    %909 = vmatpush.bf16.msra.mxu0 %v224
    %910 = vmatmul.bf16.gmra.mxu0 %v900
    %v911 = vpop.f32.mrf.mxu0
    %v912 = vadd.f32 0.0, %v911
    %v913 = vpop.f32.mrf.mxu0
    %914 = vdwg.mxu0
    %916 = vrot.lane.b32.xlu0 %v890, 96
    %v917 = vpop.permute.xlu0 %916
    %v919 = vmul.f32 %v873, %v917
    %v920 = vpack.c.bf16 %v919, %v919
    %v922 = vsel %vm176, %v920, 0
    %924 = vmatpush.bf16.msra.mxu0 0
    %925 = vmatpush.bf16.msra.mxu0 0
    %926 = vmatpush.bf16.msra.mxu0 0
    %927 = vmatpush.bf16.msra.mxu0 0
    %928 = vmatpush.bf16.msra.mxu0 0
    %929 = vmatpush.bf16.msra.mxu0 0
    %930 = vmatpush.bf16.msra.mxu0 %v225
    %931 = vmatpush.bf16.msra.mxu0 %v224
    %932 = vmatmul.bf16.gmra.mxu0 %v922
    %v933 = vpop.f32.mrf.mxu0
    %v934 = vadd.f32 0.0, %v933
    %v935 = vpop.f32.mrf.mxu0
    %936 = vdwg.mxu0
    %v937 = vmax.f32 %v912, %v934
    %v938 = vsub.f32 %v912, %v937
    %v939 = vmul.f32 %v938, 1.442695
    %v940 = vpow.pop %v939
    %v941 = vsub.f32 %v934, %v937
    %v942 = vmul.f32 %v941, 1.442695
    %v943 = vpow.pop %v942
    %v944 = vadd.f32 %v940, %v943
    %945 = vrot.lane.b32.xlu0 %v873, 64
    %v946 = vpop.permute.xlu0 %945
    %v948 = vmul.f32 %v940, %v946
    %949 = vrot.lane.b32.xlu0 %v890, 64
    %v950 = vpop.permute.xlu0 %949
    %v952 = vmul.f32 %v943, %v950
    %v953 = vadd.f32 %v948, %v952
    %v954 = vrcp.pop %v944
    %v955 = vmul.f32 %v944, %v954
    %v956 = vsub.f32 1.0, %v955
    %v957 = vmul.f32 %v954, %v956
    %v958 = vadd.f32 %v954, %v957
    %vm959 = vweird.f32 %v944
    %vm960 = vweird.f32 %v954
    %vm961 = vmor %vm959, %vm960
    %v962 = vsel %vm961, %v954, %v958
    %v963 = vand.u32 2147483647, %v944
    %vm964 = vcmp.eq.f32.partialorder %v963, 8.507059e+37
    %v965 = vand.u32 %v944, 2147483648
    %v966 = vor.u32 1.1754944e-38, %v965
    %v967 = vsel %vm964, %v966, %v962
    %v968 = vmul.f32 %v953, %v967
    %v969 = vpack.c.bf16 %v968, %v968
    %v971 = vperm.slane %v793, 0
    %v977 = vunpack.c.l.b16 %v788
    %v978 = vunpack.c.l.b16 %v789
    %v979 = vunpack.c.l.b16 %v790
    %v980 = vunpack.c.l.b16 %v791
    %v981 = vpack.c.b16 %v978, %v977
    %v982 = vpack.c.b16 %v980, %v979
    %v986 = vsel %vm176, %v969, 0
    %988 = vmatpush.bf16.msra.mxu0 0
    %989 = vmatpush.bf16.msra.mxu0 0
    %990 = vmatpush.bf16.msra.mxu0 0
    %991 = vmatpush.bf16.msra.mxu0 0
    %992 = vmatpush.bf16.msra.mxu0 0
    %993 = vmatpush.bf16.msra.mxu0 0
    %994 = vmatpush.bf16.msra.mxu0 %v982
    %995 = vmatpush.bf16.msra.mxu0 %v981
    %996 = vmatmul.bf16.gmra.mxu0 %v986
    %v997 = vpop.f32.mrf.mxu0
    %v998 = vadd.f32 %v971, %v997
    %v999 = vpop.f32.mrf.mxu0
    %1000 = vdwg.mxu0
    %v1001 = vadd.f32 %v586, %v998
    %v1002 = vsel %vm176, %v1001, 0.0
    %1003 = vadd.xlane.f32.xlu0 %v1002
    %v1004 = vpop.xlane.xlu0 %1003
    %v1005 = vmul.f32 %v1004, %v340
    %v1006 = vmul.f32 %v1001, %v1001
    %v1007 = vsel %vm176, %v1006, 0.0
    %1008 = vadd.xlane.f32.xlu0 %v1007
    %v1009 = vpop.xlane.xlu0 %1008
    %v1010 = vmul.f32 %v1009, %v340
    %v1011 = vmul.f32 %v1005, %v1005
    %v1012 = vsub.f32 %v1010, %v1011
    %v1013 = vsub.f32 %v1001, %v1005
    %v1014 = vadd.f32 %v1012, 1e-05
    %v1015 = vrsqrt.pop %v1014
    %v1016 = vmul.f32 %v1015, %v1014
    %v1017 = vmul.f32 %v1016, %v1015
    %v1018 = vmul.f32 0.5, %v1017
    %v1019 = vsub.f32 1.5, %v1018
    %v1020 = vmul.f32 %v1015, %v1019
    %vm1021 = vweird.f32 %v1014
    %vm1022 = vweird.f32 %v1015
    %vm1023 = vmor %vm1021, %vm1022
    %v1024 = vsel %vm1023, %v1015, %v1020
    %v1025 = vmul.f32 %v1013, %v1024
    %v1027 = vperm.slane %v837, 0
    %v1029 = vmul.f32 %v1025, %v1027
    %v1031 = vperm.slane %v839, 0
    %v1033 = vadd.f32 %v1029, %v1031
    %v1034 = vpack.c.bf16 %v1033, %v1033
    %v1036 = vperm.slane %v800, 0
    %v1037 = vperm.slane %v800, 1
    %v1044 = vunpack.c.l.b16 %v795
    %v1045 = vunpack.c.h.b16 %v795
    %v1046 = vunpack.c.l.b16 %v796
    %v1047 = vunpack.c.h.b16 %v796
    %v1048 = vunpack.c.l.b16 %v797
    %v1049 = vunpack.c.h.b16 %v797
    %v1050 = vunpack.c.l.b16 %v798
    %v1051 = vunpack.c.h.b16 %v798
    %v1052 = vpack.c.b16 %v1046, %v1044
    %v1053 = vpack.c.b16 %v1047, %v1045
    %v1054 = vpack.c.b16 %v1050, %v1048
    %v1055 = vpack.c.b16 %v1051, %v1049
    %v1061 = vsel %vm176, %v1034, 0
    %1063 = vmatpush.bf16.msra.mxu0 0
    %1064 = vmatpush.bf16.msra.mxu0 0
    %1065 = vmatpush.bf16.msra.mxu0 0
    %1066 = vmatpush.bf16.msra.mxu0 0
    %1067 = vmatpush.bf16.msra.mxu0 0
    %1068 = vmatpush.bf16.msra.mxu0 0
    %1069 = vmatpush.bf16.msra.mxu0 %v1054
    %1070 = vmatpush.bf16.msra.mxu0 %v1052
    %1071 = vmatmul.bf16.gmra.mxu0 %v1061
    %v1072 = vpop.f32.mrf.mxu0
    %v1073 = vadd.f32 %v1036, %v1072
    %v1074 = vpop.f32.mrf.mxu0
    %1075 = vdwg.mxu0
    %1076 = vmatpush.bf16.msra.mxu0 0
    %1077 = vmatpush.bf16.msra.mxu0 0
    %1078 = vmatpush.bf16.msra.mxu0 0
    %1079 = vmatpush.bf16.msra.mxu0 0
    %1080 = vmatpush.bf16.msra.mxu0 0
    %1081 = vmatpush.bf16.msra.mxu0 0
    %1082 = vmatpush.bf16.msra.mxu0 %v1055
    %1083 = vmatpush.bf16.msra.mxu0 %v1053
    %1084 = vmatmul.bf16.gmra.mxu0 %v1061
    %v1085 = vpop.f32.mrf.mxu0
    %v1086 = vadd.f32 %v1037, %v1085
    %v1087 = vpop.f32.mrf.mxu0
    %1088 = vdwg.mxu0
    %v1089 = vmax.f32 %v1073, 0.0
    %v1090 = vmax.f32 %v1086, 0.0
    %v1091 = vpack.c.bf16 %v1089, %v1089
    %v1092 = vpack.c.bf16 %v1090, %v1090
    %v1094 = vperm.slane %v835, 0
    %v1128 = vunpack.c.l.b16 %v802
    %v1129 = vunpack.c.l.b16 %v803
    %v1130 = vunpack.c.l.b16 %v804
    %v1131 = vunpack.c.l.b16 %v805
    %v1132 = vunpack.c.l.b16 %v806
    %v1133 = vunpack.c.l.b16 %v807
    %v1134 = vunpack.c.l.b16 %v808
    %v1135 = vunpack.c.l.b16 %v809
    %v1136 = vunpack.c.l.b16 %v810
    %v1137 = vunpack.c.l.b16 %v811
    %v1138 = vunpack.c.l.b16 %v812
    %v1139 = vunpack.c.l.b16 %v813
    %v1140 = vunpack.c.l.b16 %v814
    %v1141 = vunpack.c.l.b16 %v815
    %v1142 = vunpack.c.l.b16 %v816
    %v1143 = vunpack.c.l.b16 %v817
    %v1144 = vunpack.c.l.b16 %v818
    %v1145 = vunpack.c.l.b16 %v819
    %v1146 = vunpack.c.l.b16 %v820
    %v1147 = vunpack.c.l.b16 %v821
    %v1148 = vunpack.c.l.b16 %v822
    %v1149 = vunpack.c.l.b16 %v823
    %v1150 = vunpack.c.l.b16 %v824
    %v1151 = vunpack.c.l.b16 %v825
    %v1152 = vunpack.c.l.b16 %v826
    %v1153 = vunpack.c.l.b16 %v827
    %v1154 = vunpack.c.l.b16 %v828
    %v1155 = vunpack.c.l.b16 %v829
    %v1156 = vunpack.c.l.b16 %v830
    %v1157 = vunpack.c.l.b16 %v831
    %v1158 = vunpack.c.l.b16 %v832
    %v1159 = vunpack.c.l.b16 %v833
    %v1160 = vpack.c.b16 %v1129, %v1128
    %v1161 = vpack.c.b16 %v1131, %v1130
    %v1162 = vpack.c.b16 %v1133, %v1132
    %v1163 = vpack.c.b16 %v1135, %v1134
    %v1164 = vpack.c.b16 %v1137, %v1136
    %v1165 = vpack.c.b16 %v1139, %v1138
    %v1166 = vpack.c.b16 %v1141, %v1140
    %v1167 = vpack.c.b16 %v1143, %v1142
    %v1168 = vpack.c.b16 %v1145, %v1144
    %v1169 = vpack.c.b16 %v1147, %v1146
    %v1170 = vpack.c.b16 %v1149, %v1148
    %v1171 = vpack.c.b16 %v1151, %v1150
    %v1172 = vpack.c.b16 %v1153, %v1152
    %v1173 = vpack.c.b16 %v1155, %v1154
    %v1174 = vpack.c.b16 %v1157, %v1156
    %v1175 = vpack.c.b16 %v1159, %v1158
    %1192 = vmatpush.bf16.msra.mxu0 %v1167
    %1193 = vmatpush.bf16.msra.mxu0 %v1166
    %1194 = vmatpush.bf16.msra.mxu0 %v1165
    %1195 = vmatpush.bf16.msra.mxu0 %v1164
    %1196 = vmatpush.bf16.msra.mxu0 %v1163
    %1197 = vmatpush.bf16.msra.mxu0 %v1162
    %1198 = vmatpush.bf16.msra.mxu0 %v1161
    %1199 = vmatpush.bf16.msra.mxu0 %v1160
    %1200 = vmatmul.bf16.gmra.mxu0 %v1091
    %v1201 = vpop.f32.mrf.mxu0
    %v1202 = vadd.f32 %v1094, %v1201
    %v1203 = vpop.f32.mrf.mxu0
    %1204 = vdwg.mxu0
    %1205 = vmatpush.bf16.msra.mxu0 %v1175
    %1206 = vmatpush.bf16.msra.mxu0 %v1174
    %1207 = vmatpush.bf16.msra.mxu0 %v1173
    %1208 = vmatpush.bf16.msra.mxu0 %v1172
    %1209 = vmatpush.bf16.msra.mxu0 %v1171
    %1210 = vmatpush.bf16.msra.mxu0 %v1170
    %1211 = vmatpush.bf16.msra.mxu0 %v1169
    %1212 = vmatpush.bf16.msra.mxu0 %v1168
    %1213 = vmatmul.bf16.gmra.mxu0 %v1092
    %v1214 = vpop.f32.mrf.mxu0
    %v1215 = vadd.f32 %v1202, %v1214
    %v1216 = vpop.f32.mrf.mxu0
    %1217 = vdwg.mxu0
    %v1218 = vadd.f32 %v1033, %v1215
    %v1219 = vsel %vm176, %v1218, 0.0
    %1220 = vadd.xlane.f32.xlu0 %v1219
    %v1221 = vpop.xlane.xlu0 %1220
    %v1222 = vmul.f32 %v1221, %v340
    %v1223 = vmul.f32 %v1218, %v1218
    %v1224 = vsel %vm176, %v1223, 0.0
    %1225 = vadd.xlane.f32.xlu0 %v1224
    %v1226 = vpop.xlane.xlu0 %1225
    %v1227 = vmul.f32 %v1226, %v340
    %v1228 = vmul.f32 %v1222, %v1222
    %v1229 = vsub.f32 %v1227, %v1228
    %v1230 = vsub.f32 %v1218, %v1222
    %v1231 = vadd.f32 %v1229, 1e-05
    %v1232 = vrsqrt.pop %v1231
    %v1233 = vmul.f32 %v1232, %v1231
    %v1234 = vmul.f32 %v1233, %v1232
    %v1235 = vmul.f32 0.5, %v1234
    %v1236 = vsub.f32 1.5, %v1235
    %v1237 = vmul.f32 %v1232, %v1236
    %vm1238 = vweird.f32 %v1231
    %vm1239 = vweird.f32 %v1232
    %vm1240 = vmor %vm1238, %vm1239
    %v1241 = vsel %vm1240, %v1232, %v1237
    %v1242 = vmul.f32 %v1230, %v1241
    %v1244 = vperm.slane %v841, 0
    %v1246 = vmul.f32 %v1242, %v1244
    %v1248 = vperm.slane %v843, 0
    %v1250 = vadd.f32 %v1246, %v1248
    %v1251 = vmul.f32 %v890, %v895
    %v1252 = vpack.c.bf16 %v1251, %v1251
    %v1254 = vsel %vm176, %v1252, 0
    %1256 = vmatpush.bf16.msra.mxu0 0
    %1257 = vmatpush.bf16.msra.mxu0 0
    %1258 = vmatpush.bf16.msra.mxu0 0
    %1259 = vmatpush.bf16.msra.mxu0 0
    %1260 = vmatpush.bf16.msra.mxu0 0
    %1261 = vmatpush.bf16.msra.mxu0 0
    %1262 = vmatpush.bf16.msra.mxu0 %v225
    %1263 = vmatpush.bf16.msra.mxu0 %v224
    %1264 = vmatmul.bf16.gmra.mxu0 %v1254
    %v1265 = vpop.f32.mrf.mxu0
    %v1266 = vadd.f32 0.0, %v1265
    %v1267 = vpop.f32.mrf.mxu0
    %1268 = vdwg.mxu0
    %v1269 = vmul.f32 %v890, %v917
    %v1270 = vpack.c.bf16 %v1269, %v1269
    %v1272 = vsel %vm176, %v1270, 0
    %1274 = vmatpush.bf16.msra.mxu0 0
    %1275 = vmatpush.bf16.msra.mxu0 0
    %1276 = vmatpush.bf16.msra.mxu0 0
    %1277 = vmatpush.bf16.msra.mxu0 0
    %1278 = vmatpush.bf16.msra.mxu0 0
    %1279 = vmatpush.bf16.msra.mxu0 0
    %1280 = vmatpush.bf16.msra.mxu0 %v225
    %1281 = vmatpush.bf16.msra.mxu0 %v224
    %1282 = vmatmul.bf16.gmra.mxu0 %v1272
    %v1283 = vpop.f32.mrf.mxu0
    %v1284 = vadd.f32 0.0, %v1283
    %v1285 = vpop.f32.mrf.mxu0
    %1286 = vdwg.mxu0
    %v1287 = vmax.f32 %v1266, %v1284
    %v1288 = vsub.f32 %v1266, %v1287
    %v1289 = vmul.f32 %v1288, 1.442695
    %v1290 = vpow.pop %v1289
    %v1291 = vsub.f32 %v1284, %v1287
    %v1292 = vmul.f32 %v1291, 1.442695
    %v1293 = vpow.pop %v1292
    %v1294 = vadd.f32 %v1290, %v1293
    %v1295 = vmul.f32 %v1290, %v946
    %v1296 = vmul.f32 %v1293, %v950
    %v1297 = vadd.f32 %v1295, %v1296
    %v1298 = vrcp.pop %v1294
    %v1299 = vmul.f32 %v1294, %v1298
    %v1300 = vsub.f32 1.0, %v1299
    %v1301 = vmul.f32 %v1298, %v1300
    %v1302 = vadd.f32 %v1298, %v1301
    %vm1303 = vweird.f32 %v1294
    %vm1304 = vweird.f32 %v1298
    %vm1305 = vmor %vm1303, %vm1304
    %v1306 = vsel %vm1305, %v1298, %v1302
    %v1307 = vand.u32 2147483647, %v1294
    %vm1308 = vcmp.eq.f32.partialorder %v1307, 8.507059e+37
    %v1309 = vand.u32 %v1294, 2147483648
    %v1310 = vor.u32 1.1754944e-38, %v1309
    %v1311 = vsel %vm1308, %v1310, %v1306
    %v1312 = vmul.f32 %v1297, %v1311
    %v1313 = vpack.c.bf16 %v1312, %v1312
    %v1315 = vsel %vm176, %v1313, 0
    %1317 = vmatpush.bf16.msra.mxu0 0
    %1318 = vmatpush.bf16.msra.mxu0 0
    %1319 = vmatpush.bf16.msra.mxu0 0
    %1320 = vmatpush.bf16.msra.mxu0 0
    %1321 = vmatpush.bf16.msra.mxu0 0
    %1322 = vmatpush.bf16.msra.mxu0 0
    %1323 = vmatpush.bf16.msra.mxu0 %v982
    %1324 = vmatpush.bf16.msra.mxu0 %v981
    %1325 = vmatmul.bf16.gmra.mxu0 %v1315
    %v1326 = vpop.f32.mrf.mxu0
    %v1327 = vadd.f32 %v971, %v1326
    %v1328 = vpop.f32.mrf.mxu0
    %1329 = vdwg.mxu0
    %v1330 = vadd.f32 %v779, %v1327
    %v1331 = vsel %vm176, %v1330, 0.0
    %1332 = vadd.xlane.f32.xlu0 %v1331
    %v1333 = vpop.xlane.xlu0 %1332
    %v1334 = vmul.f32 %v1333, %v340
    %v1335 = vmul.f32 %v1330, %v1330
    %v1336 = vsel %vm176, %v1335, 0.0
    %1337 = vadd.xlane.f32.xlu0 %v1336
    %v1338 = vpop.xlane.xlu0 %1337
    %v1339 = vmul.f32 %v1338, %v340
    %v1340 = vmul.f32 %v1334, %v1334
    %v1341 = vsub.f32 %v1339, %v1340
    %v1342 = vsub.f32 %v1330, %v1334
    %v1343 = vadd.f32 %v1341, 1e-05
    %v1344 = vrsqrt.pop %v1343
    %v1345 = vmul.f32 %v1344, %v1343
    %v1346 = vmul.f32 %v1345, %v1344
    %v1347 = vmul.f32 0.5, %v1346
    %v1348 = vsub.f32 1.5, %v1347
    %v1349 = vmul.f32 %v1344, %v1348
    %vm1350 = vweird.f32 %v1343
    %vm1351 = vweird.f32 %v1344
    %vm1352 = vmor %vm1350, %vm1351
    %v1353 = vsel %vm1352, %v1344, %v1349
    %v1354 = vmul.f32 %v1342, %v1353
    %v1355 = vmul.f32 %v1354, %v1027
    %v1356 = vadd.f32 %v1355, %v1031
    %v1357 = vpack.c.bf16 %v1356, %v1356
    %v1359 = vsel %vm176, %v1357, 0
    %1361 = vmatpush.bf16.msra.mxu0 0
    %1362 = vmatpush.bf16.msra.mxu0 0
    %1363 = vmatpush.bf16.msra.mxu0 0
    %1364 = vmatpush.bf16.msra.mxu0 0
    %1365 = vmatpush.bf16.msra.mxu0 0
    %1366 = vmatpush.bf16.msra.mxu0 0
    %1367 = vmatpush.bf16.msra.mxu0 %v1054
    %1368 = vmatpush.bf16.msra.mxu0 %v1052
    %1369 = vmatmul.bf16.gmra.mxu0 %v1359
    %v1370 = vpop.f32.mrf.mxu0
    %v1371 = vadd.f32 %v1036, %v1370
    %v1372 = vpop.f32.mrf.mxu0
    %1373 = vdwg.mxu0
    %1374 = vmatpush.bf16.msra.mxu0 0
    %1375 = vmatpush.bf16.msra.mxu0 0
    %1376 = vmatpush.bf16.msra.mxu0 0
    %1377 = vmatpush.bf16.msra.mxu0 0
    %1378 = vmatpush.bf16.msra.mxu0 0
    %1379 = vmatpush.bf16.msra.mxu0 0
    %1380 = vmatpush.bf16.msra.mxu0 %v1055
    %1381 = vmatpush.bf16.msra.mxu0 %v1053
    %1382 = vmatmul.bf16.gmra.mxu0 %v1359
    %v1383 = vpop.f32.mrf.mxu0
    %v1384 = vadd.f32 %v1037, %v1383
    %v1385 = vpop.f32.mrf.mxu0
    %1386 = vdwg.mxu0
    %v1387 = vmax.f32 %v1371, 0.0
    %v1388 = vmax.f32 %v1384, 0.0
    %v1389 = vpack.c.bf16 %v1387, %v1387
    %v1390 = vpack.c.bf16 %v1388, %v1388
    %1391 = vmatpush.bf16.msra.mxu0 %v1167
    %1392 = vmatpush.bf16.msra.mxu0 %v1166
    %1393 = vmatpush.bf16.msra.mxu0 %v1165
    %1394 = vmatpush.bf16.msra.mxu0 %v1164
    %1395 = vmatpush.bf16.msra.mxu0 %v1163
    %1396 = vmatpush.bf16.msra.mxu0 %v1162
    %1397 = vmatpush.bf16.msra.mxu0 %v1161
    %1398 = vmatpush.bf16.msra.mxu0 %v1160
    %1399 = vmatmul.bf16.gmra.mxu0 %v1389
    %v1400 = vpop.f32.mrf.mxu0
    %v1401 = vadd.f32 %v1094, %v1400
    %v1402 = vpop.f32.mrf.mxu0
    %1403 = vdwg.mxu0
    %1404 = vmatpush.bf16.msra.mxu0 %v1175
    %1405 = vmatpush.bf16.msra.mxu0 %v1174
    %1406 = vmatpush.bf16.msra.mxu0 %v1173
    %1407 = vmatpush.bf16.msra.mxu0 %v1172
    %1408 = vmatpush.bf16.msra.mxu0 %v1171
    %1409 = vmatpush.bf16.msra.mxu0 %v1170
    %1410 = vmatpush.bf16.msra.mxu0 %v1169
    %1411 = vmatpush.bf16.msra.mxu0 %v1168
    %1412 = vmatmul.bf16.gmra.mxu0 %v1390
    %v1413 = vpop.f32.mrf.mxu0
    %v1414 = vadd.f32 %v1401, %v1413
    %v1415 = vpop.f32.mrf.mxu0
    %1416 = vdwg.mxu0
    %v1417 = vadd.f32 %v1356, %v1414
    %v1418 = vsel %vm176, %v1417, 0.0
    %1419 = vadd.xlane.f32.xlu0 %v1418
    %v1420 = vpop.xlane.xlu0 %1419
    %v1421 = vmul.f32 %v1420, %v340
    %v1422 = vmul.f32 %v1417, %v1417
    %v1423 = vsel %vm176, %v1422, 0.0
    %1424 = vadd.xlane.f32.xlu0 %v1423
    %v1425 = vpop.xlane.xlu0 %1424
    %v1426 = vmul.f32 %v1425, %v340
    %v1427 = vmul.f32 %v1421, %v1421
    %v1428 = vsub.f32 %v1426, %v1427
    %v1429 = vsub.f32 %v1417, %v1421
    %v1430 = vadd.f32 %v1428, 1e-05
    %v1431 = vrsqrt.pop %v1430
    %v1432 = vmul.f32 %v1431, %v1430
    %v1433 = vmul.f32 %v1432, %v1431
    %v1434 = vmul.f32 0.5, %v1433
    %v1435 = vsub.f32 1.5, %v1434
    %v1436 = vmul.f32 %v1431, %v1435
    %vm1437 = vweird.f32 %v1430
    %vm1438 = vweird.f32 %v1431
    %vm1439 = vmor %vm1437, %vm1438
    %v1440 = vsel %vm1439, %v1431, %v1436
    %v1441 = vmul.f32 %v1429, %v1440
    %v1442 = vmul.f32 %v1441, %v1244
    %v1443 = vadd.f32 %v1442, %v1248
    %v1444 = vld [vmem:[%s16] sm:$0xf]
    %v1445 = vld [vmem:[%s16 + $0x4] sm:$0xf]
    %v1446 = vld [vmem:[%s16 + $0x8] sm:$0xf]
    %v1447 = vld [vmem:[%s16 + $0xc] sm:$0xf]
    %v1448 = vld [vmem:[%s17] sm:$0x1]
    %v1449 = vpack.c.bf16 %v1250, %v1250
    %v1451 = vperm.slane %v1448, 0
    %v1457 = vunpack.c.l.b16 %v1444
    %v1458 = vunpack.c.l.b16 %v1445
    %v1459 = vunpack.c.l.b16 %v1446
    %v1460 = vunpack.c.l.b16 %v1447
    %v1461 = vpack.c.b16 %v1458, %v1457
    %v1462 = vpack.c.b16 %v1460, %v1459
    %v1466 = vsel %vm176, %v1449, 0
    %1468 = vmatpush.bf16.msra.mxu0 0
    %1469 = vmatpush.bf16.msra.mxu0 0
    %1470 = vmatpush.bf16.msra.mxu0 0
    %1471 = vmatpush.bf16.msra.mxu0 0
    %1472 = vmatpush.bf16.msra.mxu0 0
    %1473 = vmatpush.bf16.msra.mxu0 0
    %1474 = vmatpush.bf16.msra.mxu0 %v1462
    %1475 = vmatpush.bf16.msra.mxu0 %v1461
    %1476 = vmatmul.bf16.gmra.mxu0 %v1466
    %v1477 = vpop.f32.mrf.mxu0
    %v1478 = vadd.f32 %v1451, %v1477
    %v1479 = vpop.f32.mrf.mxu0
    %1480 = vdwg.mxu0
    %1481 = vst [vmem:[#allocation2] sm:$0xff] %v1478
    %v1482 = vpack.c.bf16 %v1443, %v1443
    %v1484 = vsel %vm176, %v1482, 0
    %1486 = vmatpush.bf16.msra.mxu0 0
    %1487 = vmatpush.bf16.msra.mxu0 0
    %1488 = vmatpush.bf16.msra.mxu0 0
    %1489 = vmatpush.bf16.msra.mxu0 0
    %1490 = vmatpush.bf16.msra.mxu0 0
    %1491 = vmatpush.bf16.msra.mxu0 0
    %1492 = vmatpush.bf16.msra.mxu0 %v1462
    %1493 = vmatpush.bf16.msra.mxu0 %v1461
    %1494 = vmatmul.bf16.gmra.mxu0 %v1484
    %v1495 = vpop.f32.mrf.mxu0
    %v1496 = vadd.f32 %v1451, %v1495
    %v1497 = vpop.f32.mrf.mxu0
    %1498 = vdwg.mxu0
    %1499 = vst [vmem:[#allocation2 + $0x8] sm:$0xff] %v1496
    // Predicated region
    $region74: #{tpu_custom_call.1} parent=1 // pred_check
      _
    $region75: #{tpu_custom_call.1} parent=1 // pred_check_branch
      %1501 = sbr.rel (0) target = $region77
    $region76: #{tpu_custom_call.1} parent=1 // pred_region
      %1503 = vsyncadd [#allocation3], 0
      %s1504 = sshll.u32 [#allocation2], 4
      %s1505 = int_to_ptr.vmem [resolvable:$true] %s1504
      %s1506 = sshll.u32 %s18, 4
      %s1507 = int_to_ptr.hbm [resolvable:$true] %s1506
      %1512 = dma.vmem_to_hbm [thread:$0]  %s1505, 256, %s1507, [#allocation3], 128, 128, 8
    $region77: #{tpu_custom_call.1} parent=1 // pred_fallthru
      _
    // Predicated region
    $region78: #{tpu_custom_call.1} parent=1 // pred_check
      _
    $region79: #{tpu_custom_call.1} parent=1 // pred_check_branch
      %1514 = sbr.rel (0) target = $region81
    $region80: #{tpu_custom_call.1} parent=1 // pred_region
      %1516 = dma.done [#allocation3], 256
    $region81: #{tpu_custom_call.1} parent=1 // pred_fallthru
      _
    %1517 = vsyncpa [#allocation3], 1

</llo_original>
